<compile_context>
chip_gen: v6e
topology: v6e:2x2x1
jax: 0.10.0
libtpu: 0.0.40
codegen_flags: <defaults>
</compile_context>

<pallas_src>
import functools
import math

import jax
import jax.numpy as jnp
import numpy as np
from jax.experimental import pallas as pl
from jax.experimental.pallas import tpu as pltpu


def _pair(x):
    if isinstance(x, (tuple, list)):
        return tuple(x)
    return (x, x)


def _round_up(x, m):
    return ((x + m - 1) // m) * m


def _same_padding(in_spatial_shape, kernel_size, stride, dilation):
    """Exact reimplementation of the padding math in SamePaddingConv2d.__init__."""
    ih, iw = in_spatial_shape
    kh, kw = kernel_size
    sh, sw = stride
    dh, dw = dilation
    oh = int(math.ceil(float(ih) / float(sh)))
    ow = int(math.ceil(float(iw) / float(sw)))
    pad_h = max((oh - 1) * sh + kh + (kh - 1) * (dh - 1) - ih, 0)
    pad_w = max((ow - 1) * sw + kw + (kw - 1) * (dw - 1) - iw, 0)
    pad_top = pad_h // 2
    pad_bottom = pad_h - pad_top
    pad_left = pad_w // 2
    pad_right = pad_w - pad_left
    return (oh, ow), (pad_top, pad_bottom, pad_left, pad_right)


def _conv_taps_kernel(x_ref, w_ref, b_ref, o_ref, *, tap_meta, oh, owp, ic, oc):
    """One batch element per grid step; KH*KW taps unrolled with static slices.

    x_ref: (PH, 1, Hph, Wph, IC) f32 -- all stride-phases of the padded input
           for this batch element, resident in VMEM for the whole step.
    w_ref: (KT, IC, OC) f32 -- per-tap weight matrices (resident, 1-buffered).
    b_ref: (1, OC)      f32 -- bias (resident, 1-buffered).
    o_ref: (1, OH*OWp, OC)  -- output block (exact OC, no 128 padding).
    """
    acc = jnp.zeros((oh * owp, oc), jnp.float32)
    for t, (phase, r0, c0) in enumerate(tap_meta):
        # Static, contiguous, unit-stride window of one phase slab = this
        # tap's (OH, OWp, IC) input patch.  OWp % 8 == 0 makes the collapse
        # to (OH*OWp, IC) a pure relabeling (no relayout).
        win = x_ref[phase, 0, r0:r0 + oh, c0:c0 + owp, :]
        acc = acc + jnp.dot(win.reshape(oh * owp, ic), w_ref[t],
                            preferred_element_type=jnp.float32)
    o_ref[0] = (acc + b_ref[...]).astype(o_ref.dtype)


def same_padding_conv2d(x_nchw, weight_oihw, bias, *, in_spatial_shape,
                        kernel_size, stride, dilation=1):
    """Forward pass of SamePaddingConv2d.  x is NCHW; returns NCHW."""
    kernel_size = _pair(kernel_size)
    stride = _pair(stride)
    dilation = _pair(dilation)
    (oh, ow), (pad_t, pad_b, pad_l, pad_r) = _same_padding(
        _pair(in_spatial_shape), kernel_size, stride, dilation)

    n, ic, ih, iw = x_nchw.shape
    oc = weight_oihw.shape[0]
    kh, kw = kernel_size
    sh, sw = stride
    dh, dw = dilation
    kt = kh * kw
    n_phase = sh * sw

    # ----- Wrapper-side layout prep (one pass over the input; NO im2col) ----
    x_nhwc = jnp.transpose(x_nchw, (0, 2, 3, 1))
    x_pad = jnp.pad(x_nhwc, ((0, 0), (pad_t, pad_b), (pad_l, pad_r), (0, 0)))
    ihp, iwp = ih + pad_t + pad_b, iw + pad_l + pad_r

    # Output width padded to a sublane multiple (layout-free reshape in-kernel);
    # junk columns are sliced off after the kernel.
    owp = _round_up(ow, 8)

    # Phase decomposition: regroup padded rows/cols by (row % sh, col % sw).
    # After this, tap (i, j) is the contiguous window
    #   phases[(i*dh) % sh, (j*dw) % sw][r0:r0+OH, c0:c0+OWp, :]
    # with r0 = (i*dh)//sh, c0 = (j*dw)//sw (all static Python ints).
    hph = -(-ihp // sh)
    c0_max = ((kw - 1) * dw) // sw
    wph = max(-(-iwp // sw), c0_max + owp)
    x_pad = jnp.pad(
        x_pad, ((0, 0), (0, hph * sh - ihp), (0, wph * sw - iwp), (0, 0)))
    x_ph = x_pad.reshape(n, hph, sh, wph, sw, ic)
    x_ph = jnp.transpose(x_ph, (2, 4, 0, 1, 3, 5)).reshape(n_phase, n, hph, wph, ic)
    x_ph = x_ph.astype(jnp.float32)

    # Static per-tap metadata + per-tap (IC, OC) weight slabs.
    tap_meta = []
    w_taps = []
    for i in range(kh):
        for j in range(kw):
            a, b = (i * dh) % sh, (j * dw) % sw
            tap_meta.append((a * sw + b, (i * dh) // sh, (j * dw) // sw))
            w_taps.append(jnp.transpose(weight_oihw[:, :, i, j], (1, 0)))
    w_taps = jnp.stack(w_taps, axis=0).astype(jnp.float32)        # (KT, IC, OC)
    b2d = bias.reshape(1, oc).astype(jnp.float32)

    kernel = functools.partial(_conv_taps_kernel, tap_meta=tuple(tap_meta),
                               oh=oh, owp=owp, ic=ic, oc=oc)

    # ----- VMEM budget: tile-padded, buffer-count aware ---------------------
    def _padded_bytes(shape, dtype_bytes=4):
        lead = 1
        for d in shape[:-2]:
            lead *= d
        return lead * _round_up(shape[-2], 8) * _round_up(shape[-1], 128) * dtype_bytes

    in_block = _padded_bytes((n_phase, 1, hph, wph, ic))      # double-buffered
    out_block = _padded_bytes((1, oh * owp, oc))              # double-buffered
    w_bytes = _padded_bytes((kt, ic, oc))                     # 1-buffered
    b_bytes = _padded_bytes((1, oc))                          # 1-buffered
    acc_bytes = _padded_bytes((oh * owp, oc))                 # accumulator/temps
    needed = 2 * in_block + 2 * out_block + w_bytes + b_bytes + 2 * acc_bytes
    # Raise above the 16/32 MiB default scoped limits but stay well inside
    # v7x's 64 MiB physical VMEM.
    vmem_limit = int(min(max(needed + (4 << 20), 32 << 20), 96 << 20))

    flops = 2 * n * kt * (oh * owp) * ic * oc
    bytes_accessed = 4 * (x_ph.size + w_taps.size + b2d.size + n * oh * owp * oc)

    out3 = pl.pallas_call(
        kernel,
        out_shape=jax.ShapeDtypeStruct((n, oh * owp, oc), x_nchw.dtype),
        grid_spec=pltpu.PrefetchScalarGridSpec(
            num_scalar_prefetch=0,
            grid=(n,),
            in_specs=[
                # All phase slabs of one batch element per step (auto-pipelined).
                pl.BlockSpec((n_phase, 1, hph, wph, ic),
                             lambda nb: (0, nb, 0, 0, 0)),
                # Resident weights / bias: constant block index, single buffer.
                pl.BlockSpec((kt, ic, oc), lambda nb: (0, 0, 0),
                             pipeline_mode=pl.Buffered(1)),
                pl.BlockSpec((1, oc), lambda nb: (0, 0),
                             pipeline_mode=pl.Buffered(1)),
            ],
            out_specs=pl.BlockSpec((1, oh * owp, oc), lambda nb: (nb, 0, 0)),
        ),
        compiler_params=pltpu.CompilerParams(
            dimension_semantics=("parallel",),
            vmem_limit_bytes=vmem_limit),
        cost_estimate=pl.CostEstimate(flops=flops, transcendentals=0,
                                      bytes_accessed=bytes_accessed),
    )(x_ph, w_taps, b2d)

    # Metadata-only reshape / slice (drops the OWp-OW junk columns), -> NCHW.
    out_nhwc = out3.reshape(n, oh, owp, oc)[:, :, :ow, :]
    return jnp.transpose(out_nhwc, (0, 3, 1, 2))


if __name__ == "__main__":
    # Module configuration (small, consistent with the forward pass).
    in_spatial_shape = (16, 16)
    in_channels = 4
    out_channels = 8
    kernel_size = 3
    stride = 2
    dilation = 1

    key = jax.random.PRNGKey(0)
    kx, kwt, kb = jax.random.split(key, 3)

    x = jax.random.normal(kx, (2, in_channels, 16, 16), dtype=jnp.float32)

    # Deterministic parameter init (nn.Conv2d-style uniform bound).
    fan_in = in_channels * kernel_size * kernel_size
    bound = 1.0 / math.sqrt(fan_in)
    weight = jax.random.uniform(
        kwt, (out_channels, in_channels, kernel_size, kernel_size),
        minval=-bound, maxval=bound, dtype=jnp.float32)
    bias = jax.random.uniform(
        kb, (out_channels,), minval=-bound, maxval=bound, dtype=jnp.float32)

    out = same_padding_conv2d(
        x, weight, bias,
        in_spatial_shape=in_spatial_shape,
        kernel_size=kernel_size, stride=stride, dilation=dilation)
    out = jax.block_until_ready(out)

    # f32 reference: the exact SAME-padded conv the PyTorch module computes.
    (_, _), (pad_t, pad_b, pad_l, pad_r) = _same_padding(
        _pair(in_spatial_shape), _pair(kernel_size), _pair(stride),
        _pair(dilation))
    ref = jax.lax.conv_general_dilated(
        x, weight,
        window_strides=_pair(stride),
        padding=((pad_t, pad_b), (pad_l, pad_r)),
        rhs_dilation=_pair(dilation),
        dimension_numbers=("NCHW", "OIHW", "NCHW"),
        precision=jax.lax.Precision.HIGHEST,
    ) + bias[None, :, None, None]

    assert out.shape == ref.shape, (out.shape, ref.shape)
    # Tolerance sized for the MXU's f32 pass decomposition (pass count is
    # generation/compiler dependent); indexing/tap-mapping bugs would produce
    # O(0.1..1) errors and still fail loudly.
    np.testing.assert_allclose(np.asarray(out), np.asarray(ref),
                               rtol=1e-3, atol=2e-2)
    print("KERNEL_OK")
</pallas_src>

<mosaic_0001>
module attributes {stable_mosaic.version = 11 : i64} {
  func.func @_conv_taps_kernel(%arg0: i32, %arg1: memref<4x1x9x9x4xf32, #tpu.memory_space<vmem>>, %arg2: memref<9x4x8xf32, #tpu.memory_space<vmem>>, %arg3: memref<1x8xf32, #tpu.memory_space<vmem>>, %arg4: memref<1x64x8xf32, #tpu.memory_space<vmem>>) attributes {dimension_semantics = [#tpu.dimension_semantics<parallel>], iteration_bounds = array<i64: 2>, scalar_prefetch = 0 : i64, scratch_operands = 0 : i64, tpu.core_type = #tpu.core_type<tc>, window_params = [{transform_indices = @transform_0, window_bounds = array<i64: 4, 1, 9, 9, 4>}, {pipeline_mode = #tpu.pipeline_mode<synchronous>, transform_indices = @transform_1, window_bounds = array<i64: 9, 4, 8>}, {pipeline_mode = #tpu.pipeline_mode<synchronous>, transform_indices = @transform_2, window_bounds = array<i64: 1, 8>}, {transform_indices = @transform_3, window_bounds = array<i64: 1, 64, 8>}]} {
    %cst = arith.constant 0.000000e+00 : f32
    %0 = vector.broadcast %cst : f32 to vector<64x8xf32>
    %c0 = arith.constant 0 : index
    %c0_0 = arith.constant 0 : index
    %c0_1 = arith.constant 0 : index
    %c0_2 = arith.constant 0 : index
    %c0_3 = arith.constant 0 : index
    %1 = vector.load %arg1[%c0, %c0_0, %c0_1, %c0_2, %c0_3] : memref<4x1x9x9x4xf32, #tpu.memory_space<vmem>>, vector<1x1x8x8x4xf32>
    %2 = vector.shape_cast %1 : vector<1x1x8x8x4xf32> to vector<8x8x4xf32>
    %3 = vector.shape_cast %2 : vector<8x8x4xf32> to vector<64x4xf32>
    %c0_4 = arith.constant 0 : index
    %c0_5 = arith.constant 0 : index
    %c0_6 = arith.constant 0 : index
    %4 = vector.load %arg2[%c0_4, %c0_5, %c0_6] : memref<9x4x8xf32, #tpu.memory_space<vmem>>, vector<1x4x8xf32>
    %5 = vector.shape_cast %4 : vector<1x4x8xf32> to vector<4x8xf32>
    %cst_7 = arith.constant dense<0.000000e+00> : vector<64x8xf32>
    %6 = tpu.matmul %3, %5, %cst_7 {dimension_numbers = #tpu.dot_dimension_numbers<[1], [0], [0], [1], [0, 0, 1, 1], [], []>} : vector<64x4xf32>, vector<4x8xf32>, vector<64x8xf32> -> vector<64x8xf32>
    %7 = arith.addf %0, %6 : vector<64x8xf32>
    %c1 = arith.constant 1 : index
    %c0_8 = arith.constant 0 : index
    %c0_9 = arith.constant 0 : index
    %c0_10 = arith.constant 0 : index
    %c0_11 = arith.constant 0 : index
    %8 = vector.load %arg1[%c1, %c0_8, %c0_9, %c0_10, %c0_11] : memref<4x1x9x9x4xf32, #tpu.memory_space<vmem>>, vector<1x1x8x8x4xf32>
    %9 = vector.shape_cast %8 : vector<1x1x8x8x4xf32> to vector<8x8x4xf32>
    %10 = vector.shape_cast %9 : vector<8x8x4xf32> to vector<64x4xf32>
    %c1_12 = arith.constant 1 : index
    %c0_13 = arith.constant 0 : index
    %c0_14 = arith.constant 0 : index
    %11 = vector.load %arg2[%c1_12, %c0_13, %c0_14] : memref<9x4x8xf32, #tpu.memory_space<vmem>>, vector<1x4x8xf32>
    %12 = vector.shape_cast %11 : vector<1x4x8xf32> to vector<4x8xf32>
    %cst_15 = arith.constant dense<0.000000e+00> : vector<64x8xf32>
    %13 = tpu.matmul %10, %12, %cst_15 {dimension_numbers = #tpu.dot_dimension_numbers<[1], [0], [0], [1], [0, 0, 1, 1], [], []>} : vector<64x4xf32>, vector<4x8xf32>, vector<64x8xf32> -> vector<64x8xf32>
    %14 = arith.addf %7, %13 : vector<64x8xf32>
    %c0_16 = arith.constant 0 : index
    %c0_17 = arith.constant 0 : index
    %c0_18 = arith.constant 0 : index
    %c1_19 = arith.constant 1 : index
    %c0_20 = arith.constant 0 : index
    %15 = vector.load %arg1[%c0_16, %c0_17, %c0_18, %c1_19, %c0_20] : memref<4x1x9x9x4xf32, #tpu.memory_space<vmem>>, vector<1x1x8x8x4xf32>
    %16 = vector.shape_cast %15 : vector<1x1x8x8x4xf32> to vector<8x8x4xf32>
    %17 = vector.shape_cast %16 : vector<8x8x4xf32> to vector<64x4xf32>
    %c2 = arith.constant 2 : index
    %c0_21 = arith.constant 0 : index
    %c0_22 = arith.constant 0 : index
    %18 = vector.load %arg2[%c2, %c0_21, %c0_22] : memref<9x4x8xf32, #tpu.memory_space<vmem>>, vector<1x4x8xf32>
    %19 = vector.shape_cast %18 : vector<1x4x8xf32> to vector<4x8xf32>
    %cst_23 = arith.constant dense<0.000000e+00> : vector<64x8xf32>
    %20 = tpu.matmul %17, %19, %cst_23 {dimension_numbers = #tpu.dot_dimension_numbers<[1], [0], [0], [1], [0, 0, 1, 1], [], []>} : vector<64x4xf32>, vector<4x8xf32>, vector<64x8xf32> -> vector<64x8xf32>
    %21 = arith.addf %14, %20 : vector<64x8xf32>
    %c2_24 = arith.constant 2 : index
    %c0_25 = arith.constant 0 : index
    %c0_26 = arith.constant 0 : index
    %c0_27 = arith.constant 0 : index
    %c0_28 = arith.constant 0 : index
    %22 = vector.load %arg1[%c2_24, %c0_25, %c0_26, %c0_27, %c0_28] : memref<4x1x9x9x4xf32, #tpu.memory_space<vmem>>, vector<1x1x8x8x4xf32>
    %23 = vector.shape_cast %22 : vector<1x1x8x8x4xf32> to vector<8x8x4xf32>
    %24 = vector.shape_cast %23 : vector<8x8x4xf32> to vector<64x4xf32>
    %c3 = arith.constant 3 : index
    %c0_29 = arith.constant 0 : index
    %c0_30 = arith.constant 0 : index
    %25 = vector.load %arg2[%c3, %c0_29, %c0_30] : memref<9x4x8xf32, #tpu.memory_space<vmem>>, vector<1x4x8xf32>
    %26 = vector.shape_cast %25 : vector<1x4x8xf32> to vector<4x8xf32>
    %cst_31 = arith.constant dense<0.000000e+00> : vector<64x8xf32>
    %27 = tpu.matmul %24, %26, %cst_31 {dimension_numbers = #tpu.dot_dimension_numbers<[1], [0], [0], [1], [0, 0, 1, 1], [], []>} : vector<64x4xf32>, vector<4x8xf32>, vector<64x8xf32> -> vector<64x8xf32>
    %28 = arith.addf %21, %27 : vector<64x8xf32>
    %c3_32 = arith.constant 3 : index
    %c0_33 = arith.constant 0 : index
    %c0_34 = arith.constant 0 : index
    %c0_35 = arith.constant 0 : index
    %c0_36 = arith.constant 0 : index
    %29 = vector.load %arg1[%c3_32, %c0_33, %c0_34, %c0_35, %c0_36] : memref<4x1x9x9x4xf32, #tpu.memory_space<vmem>>, vector<1x1x8x8x4xf32>
    %30 = vector.shape_cast %29 : vector<1x1x8x8x4xf32> to vector<8x8x4xf32>
    %31 = vector.shape_cast %30 : vector<8x8x4xf32> to vector<64x4xf32>
    %c4 = arith.constant 4 : index
    %c0_37 = arith.constant 0 : index
    %c0_38 = arith.constant 0 : index
    %32 = vector.load %arg2[%c4, %c0_37, %c0_38] : memref<9x4x8xf32, #tpu.memory_space<vmem>>, vector<1x4x8xf32>
    %33 = vector.shape_cast %32 : vector<1x4x8xf32> to vector<4x8xf32>
    %cst_39 = arith.constant dense<0.000000e+00> : vector<64x8xf32>
    %34 = tpu.matmul %31, %33, %cst_39 {dimension_numbers = #tpu.dot_dimension_numbers<[1], [0], [0], [1], [0, 0, 1, 1], [], []>} : vector<64x4xf32>, vector<4x8xf32>, vector<64x8xf32> -> vector<64x8xf32>
    %35 = arith.addf %28, %34 : vector<64x8xf32>
    %c2_40 = arith.constant 2 : index
    %c0_41 = arith.constant 0 : index
    %c0_42 = arith.constant 0 : index
    %c1_43 = arith.constant 1 : index
    %c0_44 = arith.constant 0 : index
    %36 = vector.load %arg1[%c2_40, %c0_41, %c0_42, %c1_43, %c0_44] : memref<4x1x9x9x4xf32, #tpu.memory_space<vmem>>, vector<1x1x8x8x4xf32>
    %37 = vector.shape_cast %36 : vector<1x1x8x8x4xf32> to vector<8x8x4xf32>
    %38 = vector.shape_cast %37 : vector<8x8x4xf32> to vector<64x4xf32>
    %c5 = arith.constant 5 : index
    %c0_45 = arith.constant 0 : index
    %c0_46 = arith.constant 0 : index
    %39 = vector.load %arg2[%c5, %c0_45, %c0_46] : memref<9x4x8xf32, #tpu.memory_space<vmem>>, vector<1x4x8xf32>
    %40 = vector.shape_cast %39 : vector<1x4x8xf32> to vector<4x8xf32>
    %cst_47 = arith.constant dense<0.000000e+00> : vector<64x8xf32>
    %41 = tpu.matmul %38, %40, %cst_47 {dimension_numbers = #tpu.dot_dimension_numbers<[1], [0], [0], [1], [0, 0, 1, 1], [], []>} : vector<64x4xf32>, vector<4x8xf32>, vector<64x8xf32> -> vector<64x8xf32>
    %42 = arith.addf %35, %41 : vector<64x8xf32>
    %c0_48 = arith.constant 0 : index
    %c0_49 = arith.constant 0 : index
    %c1_50 = arith.constant 1 : index
    %c0_51 = arith.constant 0 : index
    %c0_52 = arith.constant 0 : index
    %43 = vector.load %arg1[%c0_48, %c0_49, %c1_50, %c0_51, %c0_52] : memref<4x1x9x9x4xf32, #tpu.memory_space<vmem>>, vector<1x1x8x8x4xf32>
    %44 = vector.shape_cast %43 : vector<1x1x8x8x4xf32> to vector<8x8x4xf32>
    %45 = vector.shape_cast %44 : vector<8x8x4xf32> to vector<64x4xf32>
    %c6 = arith.constant 6 : index
    %c0_53 = arith.constant 0 : index
    %c0_54 = arith.constant 0 : index
    %46 = vector.load %arg2[%c6, %c0_53, %c0_54] : memref<9x4x8xf32, #tpu.memory_space<vmem>>, vector<1x4x8xf32>
    %47 = vector.shape_cast %46 : vector<1x4x8xf32> to vector<4x8xf32>
    %cst_55 = arith.constant dense<0.000000e+00> : vector<64x8xf32>
    %48 = tpu.matmul %45, %47, %cst_55 {dimension_numbers = #tpu.dot_dimension_numbers<[1], [0], [0], [1], [0, 0, 1, 1], [], []>} : vector<64x4xf32>, vector<4x8xf32>, vector<64x8xf32> -> vector<64x8xf32>
    %49 = arith.addf %42, %48 : vector<64x8xf32>
    %c1_56 = arith.constant 1 : index
    %c0_57 = arith.constant 0 : index
    %c1_58 = arith.constant 1 : index
    %c0_59 = arith.constant 0 : index
    %c0_60 = arith.constant 0 : index
    %50 = vector.load %arg1[%c1_56, %c0_57, %c1_58, %c0_59, %c0_60] : memref<4x1x9x9x4xf32, #tpu.memory_space<vmem>>, vector<1x1x8x8x4xf32>
    %51 = vector.shape_cast %50 : vector<1x1x8x8x4xf32> to vector<8x8x4xf32>
    %52 = vector.shape_cast %51 : vector<8x8x4xf32> to vector<64x4xf32>
    %c7 = arith.constant 7 : index
    %c0_61 = arith.constant 0 : index
    %c0_62 = arith.constant 0 : index
    %53 = vector.load %arg2[%c7, %c0_61, %c0_62] : memref<9x4x8xf32, #tpu.memory_space<vmem>>, vector<1x4x8xf32>
    %54 = vector.shape_cast %53 : vector<1x4x8xf32> to vector<4x8xf32>
    %cst_63 = arith.constant dense<0.000000e+00> : vector<64x8xf32>
    %55 = tpu.matmul %52, %54, %cst_63 {dimension_numbers = #tpu.dot_dimension_numbers<[1], [0], [0], [1], [0, 0, 1, 1], [], []>} : vector<64x4xf32>, vector<4x8xf32>, vector<64x8xf32> -> vector<64x8xf32>
    %56 = arith.addf %49, %55 : vector<64x8xf32>
    %c0_64 = arith.constant 0 : index
    %c0_65 = arith.constant 0 : index
    %c1_66 = arith.constant 1 : index
    %c1_67 = arith.constant 1 : index
    %c0_68 = arith.constant 0 : index
    %57 = vector.load %arg1[%c0_64, %c0_65, %c1_66, %c1_67, %c0_68] : memref<4x1x9x9x4xf32, #tpu.memory_space<vmem>>, vector<1x1x8x8x4xf32>
    %58 = vector.shape_cast %57 : vector<1x1x8x8x4xf32> to vector<8x8x4xf32>
    %59 = vector.shape_cast %58 : vector<8x8x4xf32> to vector<64x4xf32>
    %c8 = arith.constant 8 : index
    %c0_69 = arith.constant 0 : index
    %c0_70 = arith.constant 0 : index
    %60 = vector.load %arg2[%c8, %c0_69, %c0_70] : memref<9x4x8xf32, #tpu.memory_space<vmem>>, vector<1x4x8xf32>
    %61 = vector.shape_cast %60 : vector<1x4x8xf32> to vector<4x8xf32>
    %cst_71 = arith.constant dense<0.000000e+00> : vector<64x8xf32>
    %62 = tpu.matmul %59, %61, %cst_71 {dimension_numbers = #tpu.dot_dimension_numbers<[1], [0], [0], [1], [0, 0, 1, 1], [], []>} : vector<64x4xf32>, vector<4x8xf32>, vector<64x8xf32> -> vector<64x8xf32>
    %63 = arith.addf %56, %62 : vector<64x8xf32>
    %c0_72 = arith.constant 0 : index
    %c0_73 = arith.constant 0 : index
    %64 = vector.load %arg3[%c0_72, %c0_73] : memref<1x8xf32, #tpu.memory_space<vmem>>, vector<1x8xf32>
    %65 = vector.broadcast %64 : vector<1x8xf32> to vector<64x8xf32>
    %66 = arith.addf %63, %65 : vector<64x8xf32>
    %c0_74 = arith.constant 0 : index
    %c0_75 = arith.constant 0 : index
    %c0_76 = arith.constant 0 : index
    %67 = vector.load %arg4[%c0_74, %c0_75, %c0_76] : memref<1x64x8xf32, #tpu.memory_space<vmem>>, vector<1x64x8xf32>
    %68 = vector.shape_cast %67 : vector<1x64x8xf32> to vector<64x8xf32>
    %69 = vector.shape_cast %66 : vector<64x8xf32> to vector<1x64x8xf32>
    tpu.vector_store %arg4[%c0_74, %c0_75, %c0_76], %69 {strides = array<i32>} : memref<1x64x8xf32, #tpu.memory_space<vmem>>, vector<1x64x8xf32>,
    return
  }
  func.func @transform_0(%arg0: i32) -> (i32, i32, i32, i32, i32) {
    %c0_i32 = arith.constant 0 : i32
    %c0_i32_0 = arith.constant 0 : i32
    %c0_i32_1 = arith.constant 0 : i32
    %c0_i32_2 = arith.constant 0 : i32
    %c0_i32_3 = arith.constant 0 : i32
    return %c0_i32, %arg0, %c0_i32_0, %c0_i32_1, %c0_i32_2 : i32, i32, i32, i32, i32
  }
  func.func @transform_1(%arg0: i32) -> (i32, i32, i32) {
    %c0_i32 = arith.constant 0 : i32
    %c0_i32_0 = arith.constant 0 : i32
    %c0_i32_1 = arith.constant 0 : i32
    %c0_i32_2 = arith.constant 0 : i32
    return %c0_i32, %c0_i32_0, %c0_i32_1 : i32, i32, i32
  }
  func.func @transform_2(%arg0: i32) -> (i32, i32) {
    %c0_i32 = arith.constant 0 : i32
    %c0_i32_0 = arith.constant 0 : i32
    %c0_i32_1 = arith.constant 0 : i32
    return %c0_i32, %c0_i32_0 : i32, i32
  }
  func.func @transform_3(%arg0: i32) -> (i32, i32, i32) {
    %c0_i32 = arith.constant 0 : i32
    %c0_i32_0 = arith.constant 0 : i32
    %c0_i32_1 = arith.constant 0 : i32
    return %arg0, %c0_i32, %c0_i32_0 : i32, i32, i32
  }
}

</mosaic_0001>

<llo_original>
// kernel: tpu_custom_call.1
$region0: #{tpu_custom_call.1}
  #allocation0 [shape = 'u32[]', space=smem, size = 0x4, offset = 0x4, fixed_abs, tag = 'smem constant byte address 0x4 - core index']
  #allocation1 [shape = 'u32[144,128]{1,0:T(1,128)}', space=vmem, size = 0x12000, scoped, tag = 'internal scratch']
  %s0 = inlined_call_operand.vmem [shape: f32[4,2,9,9,4], index: 0, kind: input, shape index: {}]
  %s1 = inlined_call_operand.vmem [shape: f32[9,4,8], index: 1, kind: input, shape index: {}]
  %s2 = inlined_call_operand.vmem [shape: f32[1,8], index: 2, kind: input, shape index: {}]
  %s3 = inlined_call_operand.vmem [shape: f32[2,64,8], index: 3, kind: output, shape index: {}]
  %s4 = sld [smem:[#allocation0]]
  $region83: #{tpu_custom_call.1} parent=0
    _
  %s6 = ssub.s32 1, %s4
  %s7 = scalar_select 0, %s6, %s4
  $region1: #{tpu_custom_call.1} parent=0
    #allocation2 [shape = 'u8[589824]{0}', space=vmem, size = 0x90000, scoped, tag = 'input window, operand 0']
    loop: start=0, step=1, limit=4
    $region2: #{tpu_custom_call.1} parent=1 // loop_pre_header
      _
    $region3: #{tpu_custom_call.1} parent=1 // loop_header
      %s9 = sphi 0, %s13
      %p10 = scmp.ge.s32.totalorder %s9, 4
      %s19 = sphi 0, %s21
      %s22 = sphi 0, %s19
      %s23 = sphi 0, %s22
      %s39 = sphi 0, %s23
      %s43 = sphi 0, %s43
      %s45 = sphi 0, %s43
      %s46 = sphi 0, %s45
      %s60 = sphi 0, %s46
      %s64 = sphi 0, %s64
      %s66 = sphi 0, %s64
      %s67 = sphi 0, %s66
      %s81 = sphi 0, %s67
      %s87 = sphi 0, %s89
      %s90 = sphi 0, %s87
      %s91 = sphi 0, %s90
      %s107 = sphi 0, %s91
    $region4: #{tpu_custom_call.1} parent=1 // loop_header_branch
      %12 = sbr.rel (%p10) target = $region8
    $region5: #{tpu_custom_call.1} parent=1 // loop_body
      %s14 = ssub.s32 %s9, 1
      %s15 = ssub.s32 %s9, 2
      %s16 = sadd.s32 %s9, 1
      %s17 = ssub.s32 %s9, %s16
      %p18 = scmp.eq.s32.totalorder %s17, 0
      %s20 = sadd.s32 %s19, 1
      %s21 = scalar_select %p18, %s19, %s20
      %p24 = pneg %p18
      %p25 = scmp.eq.s32.totalorder %s9, 1
      %p26 = por %p24, %p25
      %p27 = scmp.ne.s32.totalorder %s19, %s22
      %p28 = scmp.eq.s32.totalorder %s9, 0
      %p29 = por %p27, %p28
      %p30 = scmp.ne.s32.totalorder %s19, %s22
      %p31 = scmp.eq.s32.totalorder %s14, 1
      %p32 = por %p30, %p31
      %p33 = scmp.ne.s32.totalorder %s22, %s23
      %p34 = scmp.eq.s32.totalorder %s14, 0
      %p35 = por %p33, %p34
      %p36 = scmp.ne.s32.totalorder %s22, %s23
      %p37 = scmp.eq.s32.totalorder %s15, 1
      %p38 = por %p36, %p37
      %p40 = scmp.ne.s32.totalorder %s23, %s39
      %p41 = scmp.eq.s32.totalorder %s15, 0
      %p42 = por %p40, %p41
      %s44 = sadd.s32 %s43, 1
      %p47 = scmp.eq.s32.totalorder %s9, 1
      %p48 = scmp.ne.s32.totalorder %s43, %s45
      %p49 = scmp.eq.s32.totalorder %s9, 0
      %p50 = por %p48, %p49
      %p51 = scmp.ne.s32.totalorder %s43, %s45
      %p52 = scmp.eq.s32.totalorder %s14, 1
      %p53 = por %p51, %p52
      %p54 = scmp.ne.s32.totalorder %s45, %s46
      %p55 = scmp.eq.s32.totalorder %s14, 0
      %p56 = por %p54, %p55
      %p57 = scmp.ne.s32.totalorder %s45, %s46
      %p58 = scmp.eq.s32.totalorder %s15, 1
      %p59 = por %p57, %p58
      %p61 = scmp.ne.s32.totalorder %s46, %s60
      %p62 = scmp.eq.s32.totalorder %s15, 0
      %p63 = por %p61, %p62
      %s65 = sadd.s32 %s64, 1
      %p68 = scmp.eq.s32.totalorder %s9, 1
      %p69 = scmp.ne.s32.totalorder %s64, %s66
      %p70 = scmp.eq.s32.totalorder %s9, 0
      %p71 = por %p69, %p70
      %p72 = scmp.ne.s32.totalorder %s64, %s66
      %p73 = scmp.eq.s32.totalorder %s14, 1
      %p74 = por %p72, %p73
      %p75 = scmp.ne.s32.totalorder %s66, %s67
      %p76 = scmp.eq.s32.totalorder %s14, 0
      %p77 = por %p75, %p76
      %p78 = scmp.ne.s32.totalorder %s66, %s67
      %p79 = scmp.eq.s32.totalorder %s15, 1
      %p80 = por %p78, %p79
      %p82 = scmp.ne.s32.totalorder %s67, %s81
      %p83 = scmp.eq.s32.totalorder %s15, 0
      %p84 = por %p82, %p83
      %s85 = ssub.s32 %s9, %s16
      %p86 = scmp.eq.s32.totalorder %s85, 0
      %s88 = sadd.s32 %s87, 1
      %s89 = scalar_select %p86, %s87, %s88
      %p92 = pneg %p86
      %p93 = scmp.eq.s32.totalorder %s9, 1
      %p94 = por %p92, %p93
      %p95 = scmp.ne.s32.totalorder %s87, %s90
      %p96 = scmp.eq.s32.totalorder %s9, 0
      %p97 = por %p95, %p96
      %p98 = scmp.ne.s32.totalorder %s87, %s90
      %p99 = scmp.eq.s32.totalorder %s14, 1
      %p100 = por %p98, %p99
      %p101 = scmp.ne.s32.totalorder %s90, %s91
      %p102 = scmp.eq.s32.totalorder %s14, 0
      %p103 = por %p101, %p102
      %p104 = scmp.ne.s32.totalorder %s90, %s91
      %p105 = scmp.eq.s32.totalorder %s15, 1
      %p106 = por %p104, %p105
      %p108 = scmp.ne.s32.totalorder %s91, %s107
      %p109 = scmp.eq.s32.totalorder %s15, 0
      %p110 = por %p108, %p109
      %p111 = scmp.le.s32.totalorder 1, %s9
      %p112 = scmp.lt.s32.totalorder %s9, 3
      %p113 = pnand %p111, %p112
      %p114 = pneg %p113
      // Predicated region
      $region9: #{tpu_custom_call.1} parent=5 // pred_check
        _
      $region10: #{tpu_custom_call.1} parent=5 // pred_check_branch
        %116 = sbr.rel (%p113) target = $region12
      $region11: #{tpu_custom_call.1} parent=5 // pred_region
        %s117 = ssub.s32 %s9, 1
        // Predicated region
        $region13: #{tpu_custom_call.1} parent=11 // pred_check
          %p118 = pneg %p56
        $region14: #{tpu_custom_call.1} parent=11 // pred_check_branch
          %120 = sbr.rel (%p118) target = $region16
        $region15: #{tpu_custom_call.1} parent=11 // pred_region
          _
        $region16: #{tpu_custom_call.1} parent=11 // pred_fallthru
          _
        // Predicated region
        $region17: #{tpu_custom_call.1} parent=11 // pred_check
          %p121 = pneg %p77
        $region18: #{tpu_custom_call.1} parent=11 // pred_check_branch
          %123 = sbr.rel (%p121) target = $region20
        $region19: #{tpu_custom_call.1} parent=11 // pred_region
          _
        $region20: #{tpu_custom_call.1} parent=11 // pred_fallthru
          _
      $region12: #{tpu_custom_call.1} parent=5 // pred_fallthru
        _
      %p124 = scmp.lt.s32.totalorder %s9, 2
      // Predicated region
      $region21: #{tpu_custom_call.1} parent=5 // pred_check
        %p125 = pneg %p124
      $region22: #{tpu_custom_call.1} parent=5 // pred_check_branch
        %127 = sbr.rel (%p125) target = $region24
      $region23: #{tpu_custom_call.1} parent=5 // pred_region
        // Predicated region
        $region25: #{tpu_custom_call.1} parent=23 // pred_check
          %p128 = pneg %p29
        $region26: #{tpu_custom_call.1} parent=23 // pred_check_branch
          %130 = sbr.rel (%p128) target = $region28
        $region27: #{tpu_custom_call.1} parent=23 // pred_region
          %s131 = sand.u32 %s19, 1
          %s132 = sand.u32 %s19, 1
          %s133 = smul.addr %s132, 576
          %s134 = scalar_lea.vmem [#allocation2], %s133
          %s135 = smul.addr %s9, 18
          %s136 = smul.addr %s135, 8
          %s137 = scalar_lea.vmem %s0, %s136
          // Predicated region
          $region29: #{tpu_custom_call.1} parent=27 // pred_check
            _
          $region30: #{tpu_custom_call.1} parent=27 // pred_check_branch
            %139 = sbr.rel (0) target = $region32
          $region31: #{tpu_custom_call.1} parent=27 // pred_region
            // Predicated region
            $region33: #{tpu_custom_call.1} parent=31 // pred_check
              _
            $region34: #{tpu_custom_call.1} parent=31 // pred_check_branch
              %141 = sbr.rel (0) target = $region36
            $region35: #{tpu_custom_call.1} parent=31 // pred_region
              // Predicated region
              $region48: #{tpu_custom_call.1} parent=35 // pred_check
                _
              $region49: #{tpu_custom_call.1} parent=35 // pred_check_branch
                %299 = sbr.rel (0) target = $region51
              $region50: #{tpu_custom_call.1} parent=35 // pred_region
                loop: start=0, step=1, limit=1
                $region52: #{tpu_custom_call.1} parent=50 // loop_pre_header
                  _
                $region53: #{tpu_custom_call.1} parent=50 // loop_header
                  %s301 = sphi 0, %s305
                  %p302 = scmp.ge.s32.totalorder %s301, 1
                  %s306 = sphi %s137, %s137
                  %s307 = sphi %s134, %s134
                $region54: #{tpu_custom_call.1} parent=50 // loop_header_branch
                  %304 = sbr.rel (%p302) target = $region58
                $region55: #{tpu_custom_call.1} parent=50 // loop_body
                  %v308 = vld [vmem:[%s306] sm:$0xff]
                  %309 = vst [vmem:[%s307] sm:$0xff] %v308
                  %v310 = vld [vmem:[%s306 + $0x8] sm:$0xff]
                  %311 = vst [vmem:[%s307 + $0x8] sm:$0xff] %v310
                  %v312 = vld [vmem:[%s306 + $0x10] sm:$0xff]
                  %313 = vst [vmem:[%s307 + $0x10] sm:$0xff] %v312
                  %v314 = vld [vmem:[%s306 + $0x18] sm:$0xff]
                  %315 = vst [vmem:[%s307 + $0x18] sm:$0xff] %v314
                  %v316 = vld [vmem:[%s306 + $0x20] sm:$0xff]
                  %317 = vst [vmem:[%s307 + $0x20] sm:$0xff] %v316
                  %v318 = vld [vmem:[%s306 + $0x28] sm:$0xff]
                  %319 = vst [vmem:[%s307 + $0x28] sm:$0xff] %v318
                  %v320 = vld [vmem:[%s306 + $0x30] sm:$0xff]
                  %321 = vst [vmem:[%s307 + $0x30] sm:$0xff] %v320
                  %v322 = vld [vmem:[%s306 + $0x38] sm:$0xff]
                  %323 = vst [vmem:[%s307 + $0x38] sm:$0xff] %v322
                  %v324 = vld [vmem:[%s306 + $0x40] sm:$0xff]
                  %325 = vst [vmem:[%s307 + $0x40] sm:$0xff] %v324
                  %v326 = vld [vmem:[%s306 + $0x48] sm:$0xff]
                  %327 = vst [vmem:[%s307 + $0x48] sm:$0xff] %v326
                  %v328 = vld [vmem:[%s306 + $0x50] sm:$0xff]
                  %329 = vst [vmem:[%s307 + $0x50] sm:$0xff] %v328
                  %v330 = vld [vmem:[%s306 + $0x58] sm:$0xff]
                  %331 = vst [vmem:[%s307 + $0x58] sm:$0xff] %v330
                  %v332 = vld [vmem:[%s306 + $0x60] sm:$0xff]
                  %333 = vst [vmem:[%s307 + $0x60] sm:$0xff] %v332
                  %v334 = vld [vmem:[%s306 + $0x68] sm:$0xff]
                  %335 = vst [vmem:[%s307 + $0x68] sm:$0xff] %v334
                  %v336 = vld [vmem:[%s306 + $0x70] sm:$0xff]
                  %337 = vst [vmem:[%s307 + $0x70] sm:$0xff] %v336
                  %v338 = vld [vmem:[%s306 + $0x78] sm:$0xff]
                  %339 = vst [vmem:[%s307 + $0x78] sm:$0xff] %v338
                  %v340 = vld [vmem:[%s306 + $0x80] sm:$0xff]
                  %341 = vst [vmem:[%s307 + $0x80] sm:$0xff] %v340
                  %v342 = vld [vmem:[%s306 + $0x88] sm:$0xff]
                  %343 = vst [vmem:[%s307 + $0x88] sm:$0xff] %v342
                  %v344 = vld [vmem:[%s306 + $0x120] sm:$0xff]
                  %345 = vst [vmem:[%s307 + $0x90] sm:$0xff] %v344
                  %v346 = vld [vmem:[%s306 + $0x128] sm:$0xff]
                  %347 = vst [vmem:[%s307 + $0x98] sm:$0xff] %v346
                  %v348 = vld [vmem:[%s306 + $0x130] sm:$0xff]
                  %349 = vst [vmem:[%s307 + $0xa0] sm:$0xff] %v348
                  %v350 = vld [vmem:[%s306 + $0x138] sm:$0xff]
                  %351 = vst [vmem:[%s307 + $0xa8] sm:$0xff] %v350
                  %v352 = vld [vmem:[%s306 + $0x140] sm:$0xff]
                  %353 = vst [vmem:[%s307 + $0xb0] sm:$0xff] %v352
                  %v354 = vld [vmem:[%s306 + $0x148] sm:$0xff]
                  %355 = vst [vmem:[%s307 + $0xb8] sm:$0xff] %v354
                  %v356 = vld [vmem:[%s306 + $0x150] sm:$0xff]
                  %357 = vst [vmem:[%s307 + $0xc0] sm:$0xff] %v356
                  %v358 = vld [vmem:[%s306 + $0x158] sm:$0xff]
                  %359 = vst [vmem:[%s307 + $0xc8] sm:$0xff] %v358
                  %v360 = vld [vmem:[%s306 + $0x160] sm:$0xff]
                  %361 = vst [vmem:[%s307 + $0xd0] sm:$0xff] %v360
                  %v362 = vld [vmem:[%s306 + $0x168] sm:$0xff]
                  %363 = vst [vmem:[%s307 + $0xd8] sm:$0xff] %v362
                  %v364 = vld [vmem:[%s306 + $0x170] sm:$0xff]
                  %365 = vst [vmem:[%s307 + $0xe0] sm:$0xff] %v364
                  %v366 = vld [vmem:[%s306 + $0x178] sm:$0xff]
                  %367 = vst [vmem:[%s307 + $0xe8] sm:$0xff] %v366
                  %v368 = vld [vmem:[%s306 + $0x180] sm:$0xff]
                  %369 = vst [vmem:[%s307 + $0xf0] sm:$0xff] %v368
                  %v370 = vld [vmem:[%s306 + $0x188] sm:$0xff]
                  %371 = vst [vmem:[%s307 + $0xf8] sm:$0xff] %v370
                  %v372 = vld [vmem:[%s306 + $0x190] sm:$0xff]
                  %373 = vst [vmem:[%s307 + $0x100] sm:$0xff] %v372
                  %v374 = vld [vmem:[%s306 + $0x198] sm:$0xff]
                  %375 = vst [vmem:[%s307 + $0x108] sm:$0xff] %v374
                  %v376 = vld [vmem:[%s306 + $0x1a0] sm:$0xff]
                  %377 = vst [vmem:[%s307 + $0x110] sm:$0xff] %v376
                  %v378 = vld [vmem:[%s306 + $0x1a8] sm:$0xff]
                  %379 = vst [vmem:[%s307 + $0x118] sm:$0xff] %v378
                  %v380 = vld [vmem:[%s306 + $0x240] sm:$0xff]
                  %381 = vst [vmem:[%s307 + $0x120] sm:$0xff] %v380
                  %v382 = vld [vmem:[%s306 + $0x248] sm:$0xff]
                  %383 = vst [vmem:[%s307 + $0x128] sm:$0xff] %v382
                  %v384 = vld [vmem:[%s306 + $0x250] sm:$0xff]
                  %385 = vst [vmem:[%s307 + $0x130] sm:$0xff] %v384
                  %v386 = vld [vmem:[%s306 + $0x258] sm:$0xff]
                  %387 = vst [vmem:[%s307 + $0x138] sm:$0xff] %v386
                  %v388 = vld [vmem:[%s306 + $0x260] sm:$0xff]
                  %389 = vst [vmem:[%s307 + $0x140] sm:$0xff] %v388
                  %v390 = vld [vmem:[%s306 + $0x268] sm:$0xff]
                  %391 = vst [vmem:[%s307 + $0x148] sm:$0xff] %v390
                  %v392 = vld [vmem:[%s306 + $0x270] sm:$0xff]
                  %393 = vst [vmem:[%s307 + $0x150] sm:$0xff] %v392
                  %v394 = vld [vmem:[%s306 + $0x278] sm:$0xff]
                  %395 = vst [vmem:[%s307 + $0x158] sm:$0xff] %v394
                  %v396 = vld [vmem:[%s306 + $0x280] sm:$0xff]
                  %397 = vst [vmem:[%s307 + $0x160] sm:$0xff] %v396
                  %v398 = vld [vmem:[%s306 + $0x288] sm:$0xff]
                  %399 = vst [vmem:[%s307 + $0x168] sm:$0xff] %v398
                  %v400 = vld [vmem:[%s306 + $0x290] sm:$0xff]
                  %401 = vst [vmem:[%s307 + $0x170] sm:$0xff] %v400
                  %v402 = vld [vmem:[%s306 + $0x298] sm:$0xff]
                  %403 = vst [vmem:[%s307 + $0x178] sm:$0xff] %v402
                  %v404 = vld [vmem:[%s306 + $0x2a0] sm:$0xff]
                  %405 = vst [vmem:[%s307 + $0x180] sm:$0xff] %v404
                  %v406 = vld [vmem:[%s306 + $0x2a8] sm:$0xff]
                  %407 = vst [vmem:[%s307 + $0x188] sm:$0xff] %v406
                  %v408 = vld [vmem:[%s306 + $0x2b0] sm:$0xff]
                  %409 = vst [vmem:[%s307 + $0x190] sm:$0xff] %v408
                  %v410 = vld [vmem:[%s306 + $0x2b8] sm:$0xff]
                  %411 = vst [vmem:[%s307 + $0x198] sm:$0xff] %v410
                  %v412 = vld [vmem:[%s306 + $0x2c0] sm:$0xff]
                  %413 = vst [vmem:[%s307 + $0x1a0] sm:$0xff] %v412
                  %v414 = vld [vmem:[%s306 + $0x2c8] sm:$0xff]
                  %415 = vst [vmem:[%s307 + $0x1a8] sm:$0xff] %v414
                  %v416 = vld [vmem:[%s306 + $0x360] sm:$0xff]
                  %417 = vst [vmem:[%s307 + $0x1b0] sm:$0xff] %v416
                  %v418 = vld [vmem:[%s306 + $0x368] sm:$0xff]
                  %419 = vst [vmem:[%s307 + $0x1b8] sm:$0xff] %v418
                  %v420 = vld [vmem:[%s306 + $0x370] sm:$0xff]
                  %421 = vst [vmem:[%s307 + $0x1c0] sm:$0xff] %v420
                  %v422 = vld [vmem:[%s306 + $0x378] sm:$0xff]
                  %423 = vst [vmem:[%s307 + $0x1c8] sm:$0xff] %v422
                  %v424 = vld [vmem:[%s306 + $0x380] sm:$0xff]
                  %425 = vst [vmem:[%s307 + $0x1d0] sm:$0xff] %v424
                  %v426 = vld [vmem:[%s306 + $0x388] sm:$0xff]
                  %427 = vst [vmem:[%s307 + $0x1d8] sm:$0xff] %v426
                  %v428 = vld [vmem:[%s306 + $0x390] sm:$0xff]
                  %429 = vst [vmem:[%s307 + $0x1e0] sm:$0xff] %v428
                  %v430 = vld [vmem:[%s306 + $0x398] sm:$0xff]
                  %431 = vst [vmem:[%s307 + $0x1e8] sm:$0xff] %v430
                  %v432 = vld [vmem:[%s306 + $0x3a0] sm:$0xff]
                  %433 = vst [vmem:[%s307 + $0x1f0] sm:$0xff] %v432
                  %v434 = vld [vmem:[%s306 + $0x3a8] sm:$0xff]
                  %435 = vst [vmem:[%s307 + $0x1f8] sm:$0xff] %v434
                  %v436 = vld [vmem:[%s306 + $0x3b0] sm:$0xff]
                  %437 = vst [vmem:[%s307 + $0x200] sm:$0xff] %v436
                  %v438 = vld [vmem:[%s306 + $0x3b8] sm:$0xff]
                  %439 = vst [vmem:[%s307 + $0x208] sm:$0xff] %v438
                  %v440 = vld [vmem:[%s306 + $0x3c0] sm:$0xff]
                  %441 = vst [vmem:[%s307 + $0x210] sm:$0xff] %v440
                  %v442 = vld [vmem:[%s306 + $0x3c8] sm:$0xff]
                  %443 = vst [vmem:[%s307 + $0x218] sm:$0xff] %v442
                  %v444 = vld [vmem:[%s306 + $0x3d0] sm:$0xff]
                  %445 = vst [vmem:[%s307 + $0x220] sm:$0xff] %v444
                  %v446 = vld [vmem:[%s306 + $0x3d8] sm:$0xff]
                  %447 = vst [vmem:[%s307 + $0x228] sm:$0xff] %v446
                  %v448 = vld [vmem:[%s306 + $0x3e0] sm:$0xff]
                  %449 = vst [vmem:[%s307 + $0x230] sm:$0xff] %v448
                  %v450 = vld [vmem:[%s306 + $0x3e8] sm:$0xff]
                  %451 = vst [vmem:[%s307 + $0x238] sm:$0xff] %v450
                $region56: #{tpu_custom_call.1} parent=50 // loop_footer
                  %s305 = sadd.s32 1, %s301
                $region57: #{tpu_custom_call.1} parent=50 // loop_footer_branch
                  %300 = sbr.rel target = $region53
                $region58: #{tpu_custom_call.1} parent=50 // loop_exit
                  _
              $region51: #{tpu_custom_call.1} parent=35 // pred_fallthru
                _
              // Predicated region
              $region59: #{tpu_custom_call.1} parent=35 // pred_check
                _
              $region60: #{tpu_custom_call.1} parent=35 // pred_check_branch
                %453 = sbr.rel target = $region62
              $region61: #{tpu_custom_call.1} parent=35 // pred_region
                _
              $region62: #{tpu_custom_call.1} parent=35 // pred_fallthru
                _
            $region36: #{tpu_custom_call.1} parent=31 // pred_fallthru
              _
            // Predicated region
            $region37: #{tpu_custom_call.1} parent=31 // pred_check
              _
            $region38: #{tpu_custom_call.1} parent=31 // pred_check_branch
              %143 = sbr.rel target = $region40
            $region39: #{tpu_custom_call.1} parent=31 // pred_region
              %s145 = ssub.s32 256, 1
              loop: start=0, step=1, limit=1
              $region41: #{tpu_custom_call.1} parent=39 // loop_pre_header
                _
              $region42: #{tpu_custom_call.1} parent=39 // loop_header
                %s147 = sphi 0, %s151
                %p148 = scmp.ge.s32.totalorder %s147, 1
                %s152 = sphi %s137, %s137
                %s153 = sphi %s134, %s134
              $region43: #{tpu_custom_call.1} parent=39 // loop_header_branch
                %150 = sbr.rel (%p148) target = $region47
              $region44: #{tpu_custom_call.1} parent=39 // loop_body
                %v154 = vld [vmem:[%s152] sm:%s145]
                %155 = vst [vmem:[%s153] sm:%s145] %v154
                %v156 = vld [vmem:[%s152 + $0x8] sm:%s145]
                %157 = vst [vmem:[%s153 + $0x8] sm:%s145] %v156
                %v158 = vld [vmem:[%s152 + $0x10] sm:%s145]
                %159 = vst [vmem:[%s153 + $0x10] sm:%s145] %v158
                %v160 = vld [vmem:[%s152 + $0x18] sm:%s145]
                %161 = vst [vmem:[%s153 + $0x18] sm:%s145] %v160
                %v162 = vld [vmem:[%s152 + $0x20] sm:%s145]
                %163 = vst [vmem:[%s153 + $0x20] sm:%s145] %v162
                %v164 = vld [vmem:[%s152 + $0x28] sm:%s145]
                %165 = vst [vmem:[%s153 + $0x28] sm:%s145] %v164
                %v166 = vld [vmem:[%s152 + $0x30] sm:%s145]
                %167 = vst [vmem:[%s153 + $0x30] sm:%s145] %v166
                %v168 = vld [vmem:[%s152 + $0x38] sm:%s145]
                %169 = vst [vmem:[%s153 + $0x38] sm:%s145] %v168
                %v170 = vld [vmem:[%s152 + $0x40] sm:%s145]
                %171 = vst [vmem:[%s153 + $0x40] sm:%s145] %v170
                %v172 = vld [vmem:[%s152 + $0x48] sm:%s145]
                %173 = vst [vmem:[%s153 + $0x48] sm:%s145] %v172
                %v174 = vld [vmem:[%s152 + $0x50] sm:%s145]
                %175 = vst [vmem:[%s153 + $0x50] sm:%s145] %v174
                %v176 = vld [vmem:[%s152 + $0x58] sm:%s145]
                %177 = vst [vmem:[%s153 + $0x58] sm:%s145] %v176
                %v178 = vld [vmem:[%s152 + $0x60] sm:%s145]
                %179 = vst [vmem:[%s153 + $0x60] sm:%s145] %v178
                %v180 = vld [vmem:[%s152 + $0x68] sm:%s145]
                %181 = vst [vmem:[%s153 + $0x68] sm:%s145] %v180
                %v182 = vld [vmem:[%s152 + $0x70] sm:%s145]
                %183 = vst [vmem:[%s153 + $0x70] sm:%s145] %v182
                %v184 = vld [vmem:[%s152 + $0x78] sm:%s145]
                %185 = vst [vmem:[%s153 + $0x78] sm:%s145] %v184
                %v186 = vld [vmem:[%s152 + $0x80] sm:%s145]
                %187 = vst [vmem:[%s153 + $0x80] sm:%s145] %v186
                %v188 = vld [vmem:[%s152 + $0x88] sm:%s145]
                %189 = vst [vmem:[%s153 + $0x88] sm:%s145] %v188
                %v190 = vld [vmem:[%s152 + $0x120] sm:%s145]
                %191 = vst [vmem:[%s153 + $0x90] sm:%s145] %v190
                %v192 = vld [vmem:[%s152 + $0x128] sm:%s145]
                %193 = vst [vmem:[%s153 + $0x98] sm:%s145] %v192
                %v194 = vld [vmem:[%s152 + $0x130] sm:%s145]
                %195 = vst [vmem:[%s153 + $0xa0] sm:%s145] %v194
                %v196 = vld [vmem:[%s152 + $0x138] sm:%s145]
                %197 = vst [vmem:[%s153 + $0xa8] sm:%s145] %v196
                %v198 = vld [vmem:[%s152 + $0x140] sm:%s145]
                %199 = vst [vmem:[%s153 + $0xb0] sm:%s145] %v198
                %v200 = vld [vmem:[%s152 + $0x148] sm:%s145]
                %201 = vst [vmem:[%s153 + $0xb8] sm:%s145] %v200
                %v202 = vld [vmem:[%s152 + $0x150] sm:%s145]
                %203 = vst [vmem:[%s153 + $0xc0] sm:%s145] %v202
                %v204 = vld [vmem:[%s152 + $0x158] sm:%s145]
                %205 = vst [vmem:[%s153 + $0xc8] sm:%s145] %v204
                %v206 = vld [vmem:[%s152 + $0x160] sm:%s145]
                %207 = vst [vmem:[%s153 + $0xd0] sm:%s145] %v206
                %v208 = vld [vmem:[%s152 + $0x168] sm:%s145]
                %209 = vst [vmem:[%s153 + $0xd8] sm:%s145] %v208
                %v210 = vld [vmem:[%s152 + $0x170] sm:%s145]
                %211 = vst [vmem:[%s153 + $0xe0] sm:%s145] %v210
                %v212 = vld [vmem:[%s152 + $0x178] sm:%s145]
                %213 = vst [vmem:[%s153 + $0xe8] sm:%s145] %v212
                %v214 = vld [vmem:[%s152 + $0x180] sm:%s145]
                %215 = vst [vmem:[%s153 + $0xf0] sm:%s145] %v214
                %v216 = vld [vmem:[%s152 + $0x188] sm:%s145]
                %217 = vst [vmem:[%s153 + $0xf8] sm:%s145] %v216
                %v218 = vld [vmem:[%s152 + $0x190] sm:%s145]
                %219 = vst [vmem:[%s153 + $0x100] sm:%s145] %v218
                %v220 = vld [vmem:[%s152 + $0x198] sm:%s145]
                %221 = vst [vmem:[%s153 + $0x108] sm:%s145] %v220
                %v222 = vld [vmem:[%s152 + $0x1a0] sm:%s145]
                %223 = vst [vmem:[%s153 + $0x110] sm:%s145] %v222
                %v224 = vld [vmem:[%s152 + $0x1a8] sm:%s145]
                %225 = vst [vmem:[%s153 + $0x118] sm:%s145] %v224
                %v226 = vld [vmem:[%s152 + $0x240] sm:%s145]
                %227 = vst [vmem:[%s153 + $0x120] sm:%s145] %v226
                %v228 = vld [vmem:[%s152 + $0x248] sm:%s145]
                %229 = vst [vmem:[%s153 + $0x128] sm:%s145] %v228
                %v230 = vld [vmem:[%s152 + $0x250] sm:%s145]
                %231 = vst [vmem:[%s153 + $0x130] sm:%s145] %v230
                %v232 = vld [vmem:[%s152 + $0x258] sm:%s145]
                %233 = vst [vmem:[%s153 + $0x138] sm:%s145] %v232
                %v234 = vld [vmem:[%s152 + $0x260] sm:%s145]
                %235 = vst [vmem:[%s153 + $0x140] sm:%s145] %v234
                %v236 = vld [vmem:[%s152 + $0x268] sm:%s145]
                %237 = vst [vmem:[%s153 + $0x148] sm:%s145] %v236
                %v238 = vld [vmem:[%s152 + $0x270] sm:%s145]
                %239 = vst [vmem:[%s153 + $0x150] sm:%s145] %v238
                %v240 = vld [vmem:[%s152 + $0x278] sm:%s145]
                %241 = vst [vmem:[%s153 + $0x158] sm:%s145] %v240
                %v242 = vld [vmem:[%s152 + $0x280] sm:%s145]
                %243 = vst [vmem:[%s153 + $0x160] sm:%s145] %v242
                %v244 = vld [vmem:[%s152 + $0x288] sm:%s145]
                %245 = vst [vmem:[%s153 + $0x168] sm:%s145] %v244
                %v246 = vld [vmem:[%s152 + $0x290] sm:%s145]
                %247 = vst [vmem:[%s153 + $0x170] sm:%s145] %v246
                %v248 = vld [vmem:[%s152 + $0x298] sm:%s145]
                %249 = vst [vmem:[%s153 + $0x178] sm:%s145] %v248
                %v250 = vld [vmem:[%s152 + $0x2a0] sm:%s145]
                %251 = vst [vmem:[%s153 + $0x180] sm:%s145] %v250
                %v252 = vld [vmem:[%s152 + $0x2a8] sm:%s145]
                %253 = vst [vmem:[%s153 + $0x188] sm:%s145] %v252
                %v254 = vld [vmem:[%s152 + $0x2b0] sm:%s145]
                %255 = vst [vmem:[%s153 + $0x190] sm:%s145] %v254
                %v256 = vld [vmem:[%s152 + $0x2b8] sm:%s145]
                %257 = vst [vmem:[%s153 + $0x198] sm:%s145] %v256
                %v258 = vld [vmem:[%s152 + $0x2c0] sm:%s145]
                %259 = vst [vmem:[%s153 + $0x1a0] sm:%s145] %v258
                %v260 = vld [vmem:[%s152 + $0x2c8] sm:%s145]
                %261 = vst [vmem:[%s153 + $0x1a8] sm:%s145] %v260
                %v262 = vld [vmem:[%s152 + $0x360] sm:%s145]
                %263 = vst [vmem:[%s153 + $0x1b0] sm:%s145] %v262
                %v264 = vld [vmem:[%s152 + $0x368] sm:%s145]
                %265 = vst [vmem:[%s153 + $0x1b8] sm:%s145] %v264
                %v266 = vld [vmem:[%s152 + $0x370] sm:%s145]
                %267 = vst [vmem:[%s153 + $0x1c0] sm:%s145] %v266
                %v268 = vld [vmem:[%s152 + $0x378] sm:%s145]
                %269 = vst [vmem:[%s153 + $0x1c8] sm:%s145] %v268
                %v270 = vld [vmem:[%s152 + $0x380] sm:%s145]
                %271 = vst [vmem:[%s153 + $0x1d0] sm:%s145] %v270
                %v272 = vld [vmem:[%s152 + $0x388] sm:%s145]
                %273 = vst [vmem:[%s153 + $0x1d8] sm:%s145] %v272
                %v274 = vld [vmem:[%s152 + $0x390] sm:%s145]
                %275 = vst [vmem:[%s153 + $0x1e0] sm:%s145] %v274
                %v276 = vld [vmem:[%s152 + $0x398] sm:%s145]
                %277 = vst [vmem:[%s153 + $0x1e8] sm:%s145] %v276
                %v278 = vld [vmem:[%s152 + $0x3a0] sm:%s145]
                %279 = vst [vmem:[%s153 + $0x1f0] sm:%s145] %v278
                %v280 = vld [vmem:[%s152 + $0x3a8] sm:%s145]
                %281 = vst [vmem:[%s153 + $0x1f8] sm:%s145] %v280
                %v282 = vld [vmem:[%s152 + $0x3b0] sm:%s145]
                %283 = vst [vmem:[%s153 + $0x200] sm:%s145] %v282
                %v284 = vld [vmem:[%s152 + $0x3b8] sm:%s145]
                %285 = vst [vmem:[%s153 + $0x208] sm:%s145] %v284
                %v286 = vld [vmem:[%s152 + $0x3c0] sm:%s145]
                %287 = vst [vmem:[%s153 + $0x210] sm:%s145] %v286
                %v288 = vld [vmem:[%s152 + $0x3c8] sm:%s145]
                %289 = vst [vmem:[%s153 + $0x218] sm:%s145] %v288
                %v290 = vld [vmem:[%s152 + $0x3d0] sm:%s145]
                %291 = vst [vmem:[%s153 + $0x220] sm:%s145] %v290
                %v292 = vld [vmem:[%s152 + $0x3d8] sm:%s145]
                %293 = vst [vmem:[%s153 + $0x228] sm:%s145] %v292
                %v294 = vld [vmem:[%s152 + $0x3e0] sm:%s145]
                %295 = vst [vmem:[%s153 + $0x230] sm:%s145] %v294
                %v296 = vld [vmem:[%s152 + $0x3e8] sm:%s145]
                %297 = vst [vmem:[%s153 + $0x238] sm:%s145] %v296
              $region45: #{tpu_custom_call.1} parent=39 // loop_footer
                %s151 = sadd.s32 1, %s147
              $region46: #{tpu_custom_call.1} parent=39 // loop_footer_branch
                %146 = sbr.rel target = $region42
              $region47: #{tpu_custom_call.1} parent=39 // loop_exit
                _
            $region40: #{tpu_custom_call.1} parent=31 // pred_fallthru
              _
          $region32: #{tpu_custom_call.1} parent=27 // pred_fallthru
            _
          %454 = vnop
        $region28: #{tpu_custom_call.1} parent=23 // pred_fallthru
          _
      $region24: #{tpu_custom_call.1} parent=5 // pred_fallthru
        _
      %p455 = scmp.le.s32.totalorder 1, %s9
      %p456 = scmp.lt.s32.totalorder %s9, 3
      %p457 = pnand %p455, %p456
      %p458 = pneg %p457
      // Predicated region
      $region63: #{tpu_custom_call.1} parent=5 // pred_check
        _
      $region64: #{tpu_custom_call.1} parent=5 // pred_check_branch
        %460 = sbr.rel (%p457) target = $region66
      $region65: #{tpu_custom_call.1} parent=5 // pred_region
        %s461 = ssub.s32 %s9, 1
        %s462 = sand.u32 %s22, 1
        %s463 = sand.u32 %s22, 1
        %s464 = smul.addr %s463, 576
        %s465 = scalar_lea.vmem [#allocation2], %s464
        // Predicated region
        $region67: #{tpu_custom_call.1} parent=65 // pred_check
          %p466 = pneg %p35
        $region68: #{tpu_custom_call.1} parent=65 // pred_check_branch
          %468 = sbr.rel (%p466) target = $region70
        $region69: #{tpu_custom_call.1} parent=65 // pred_region
          _
        $region70: #{tpu_custom_call.1} parent=65 // pred_fallthru
          _
        %s469 = sand.u32 %s22, 1
        %s470 = sand.u32 %s22, 1
        %s471 = smul.addr %s470, 576
        %s472 = scalar_lea.vmem [#allocation2], %s471
        %p473 = pneg %p35
        %p474 = pneg %p32
        %p475 = pneg %p56
        %p476 = pneg %p53
        %p477 = pneg %p77
        %p478 = pneg %p74
        %p479 = pneg %p103
        %p480 = pneg %p100
        %p481 = scmp.lt.s32.totalorder %s14, 1
        %s482 = scalar_select %p481, %s14, 1
        %s483 = smul.addr %s482, 8
        %s484 = smul.addr %s483, 8
        %s485 = scalar_lea.vmem %s3, %s484
        %p486 = scmp.lt.s32.totalorder %s14, 1
        %s487 = scalar_select %p486, %s14, 1
        %s488 = smul.addr %s487, 8
        %s489 = smul.addr %s488, 8
        %s490 = scalar_lea.vmem %s3, %s489
        %v491 = vld [vmem:[%s465] sm:$0xff]
        %v492 = vld [vmem:[%s465 + $0x10] sm:$0xff]
        %v493 = vld [vmem:[%s465 + $0x20] sm:$0xff]
        %v494 = vld [vmem:[%s465 + $0x30] sm:$0xff]
        %v495 = vld [vmem:[%s465 + $0x40] sm:$0xff]
        %v496 = vld [vmem:[%s465 + $0x50] sm:$0xff]
        %v497 = vld [vmem:[%s465 + $0x60] sm:$0xff]
        %v498 = vld [vmem:[%s465 + $0x70] sm:$0xff]
        %v499 = vld [vmem:[%s1] sm:$0xf]
        %s500 = scalar_lea.vmem %s465, 144 [#allocation2]
        %v501 = vld [vmem:[%s500] sm:$0xff]
        %v502 = vld [vmem:[%s500 + $0x10] sm:$0xff]
        %v503 = vld [vmem:[%s500 + $0x20] sm:$0xff]
        %v504 = vld [vmem:[%s500 + $0x30] sm:$0xff]
        %v505 = vld [vmem:[%s500 + $0x40] sm:$0xff]
        %v506 = vld [vmem:[%s500 + $0x50] sm:$0xff]
        %v507 = vld [vmem:[%s500 + $0x60] sm:$0xff]
        %v508 = vld [vmem:[%s500 + $0x70] sm:$0xff]
        %s509 = scalar_lea.vmem %s1, 4
        %v510 = vld [vmem:[%s509] sm:$0xf]
        %vm511 = vcmask 31744
        %v513 = vsel %vm511, %v501, 0
        %v516 = vsel %vm511, %v502, 0
        %v519 = vsel %vm511, %v503, 0
        %v522 = vsel %vm511, %v504, 0
        %v525 = vsel %vm511, %v505, 0
        %v528 = vsel %vm511, %v506, 0
        %v531 = vsel %vm511, %v507, 0
        %v534 = vsel %vm511, %v508, 0
        %vm536 = vcmask 1043456
        %v538 = vsel %vm536, %v510, 0
        %540 = vmatprep.subr.mxu0 0.0
        %541 = vmatpush1.msra.mxu0 0.0
        %542 = vmatprep.subr.mxu0 0.0
        %543 = vmatpush1.msra.mxu0 0.0
        %544 = vmatprep.subr.mxu0 0.0
        %545 = vmatpush1.msra.mxu0 0.0
        %546 = vmatprep.subr.mxu0 0.0
        %547 = vmatpush1.msra.mxu0 0.0
        %548 = vmatprep.subr.mxu0 0.0
        %549 = vmatpush1.msra.mxu0 0.0
        %550 = vmatprep.subr.mxu0 0.0
        %551 = vmatpush1.msra.mxu0 0.0
        %552 = vmatprep.subr.mxu0 0.0
        %553 = vmatpush1.msra.mxu0 0.0
        %554 = vmatprep.subr.mxu0 0.0
        %555 = vmatpush1.msra.mxu0 0.0
        %556 = vmatprep.subr.mxu0 0.0
        %557 = vmatpush1.msra.mxu0 0.0
        %558 = vmatprep.subr.mxu0 0.0
        %559 = vmatpush1.msra.mxu0 0.0
        %560 = vmatprep.subr.mxu0 0.0
        %561 = vmatpush1.msra.mxu0 0.0
        %562 = vmatprep.subr.mxu0 0.0
        %563 = vmatpush1.msra.mxu0 0.0
        %564 = vmatprep.subr.mxu0 0.0
        %565 = vmatpush1.msra.mxu0 0.0
        %566 = vmatprep.subr.mxu0 0.0
        %567 = vmatpush1.msra.mxu0 0.0
        %568 = vmatprep.subr.mxu0 0.0
        %569 = vmatpush1.msra.mxu0 0.0
        %570 = vmatprep.subr.mxu0 0.0
        %571 = vmatpush1.msra.mxu0 %v538
        %572 = vmatprep.subr.mxu0 0.0
        %573 = vmatpush2.msra.mxu0 0.0
        %574 = vmatprep.subr.mxu0 0.0
        %575 = vmatpush2.msra.mxu0 0.0
        %576 = vmatprep.subr.mxu0 0.0
        %577 = vmatpush2.msra.mxu0 0.0
        %578 = vmatprep.subr.mxu0 0.0
        %579 = vmatpush2.msra.mxu0 0.0
        %580 = vmatprep.subr.mxu0 0.0
        %581 = vmatpush2.msra.mxu0 0.0
        %582 = vmatprep.subr.mxu0 0.0
        %583 = vmatpush2.msra.mxu0 0.0
        %584 = vmatprep.subr.mxu0 0.0
        %585 = vmatpush2.msra.mxu0 0.0
        %586 = vmatprep.subr.mxu0 0.0
        %587 = vmatpush2.msra.mxu0 0.0
        %588 = vmatprep.subr.mxu0 0.0
        %589 = vmatpush2.msra.mxu0 0.0
        %590 = vmatprep.subr.mxu0 0.0
        %591 = vmatpush2.msra.mxu0 0.0
        %592 = vmatprep.subr.mxu0 0.0
        %593 = vmatpush2.msra.mxu0 0.0
        %594 = vmatprep.subr.mxu0 0.0
        %595 = vmatpush2.msra.mxu0 0.0
        %596 = vmatprep.subr.mxu0 0.0
        %597 = vmatpush2.msra.mxu0 0.0
        %598 = vmatprep.subr.mxu0 0.0
        %599 = vmatpush2.msra.mxu0 0.0
        %600 = vmatprep.subr.mxu0 0.0
        %601 = vmatpush2.msra.mxu0 0.0
        %602 = vmatprep.subr.mxu0 0.0
        %603 = vmatpush2.msra.mxu0 0.0
        %604 = vmatprep.mubr.f32.mxu0 0.0
        %605 = vmatmul.mubr.f32.gmra.mxu0 %v513
        %v606 = vpop.f32.mrf.mxu0
        %v607 = vadd.f32 0.0, %v606
        %v608 = vpop.f32.mrf.mxu0
        %609 = vmatprep.mubr.f32.mxu0 0.0
        %610 = vmatmul.mubr.f32.gmra.mxu0 %v516
        %v611 = vpop.f32.mrf.mxu0
        %v612 = vadd.f32 0.0, %v611
        %v613 = vpop.f32.mrf.mxu0
        %614 = vmatprep.mubr.f32.mxu0 0.0
        %615 = vmatmul.mubr.f32.gmra.mxu0 %v519
        %v616 = vpop.f32.mrf.mxu0
        %v617 = vadd.f32 0.0, %v616
        %v618 = vpop.f32.mrf.mxu0
        %619 = vmatprep.mubr.f32.mxu0 0.0
        %620 = vmatmul.mubr.f32.gmra.mxu0 %v522
        %v621 = vpop.f32.mrf.mxu0
        %v622 = vadd.f32 0.0, %v621
        %v623 = vpop.f32.mrf.mxu0
        %624 = vmatprep.mubr.f32.mxu0 0.0
        %625 = vmatmul.mubr.f32.gmra.mxu0 %v525
        %v626 = vpop.f32.mrf.mxu0
        %v627 = vadd.f32 0.0, %v626
        %v628 = vpop.f32.mrf.mxu0
        %629 = vmatprep.mubr.f32.mxu0 0.0
        %630 = vmatmul.mubr.f32.gmra.mxu0 %v528
        %v631 = vpop.f32.mrf.mxu0
        %v632 = vadd.f32 0.0, %v631
        %v633 = vpop.f32.mrf.mxu0
        %634 = vmatprep.mubr.f32.mxu0 0.0
        %635 = vmatmul.mubr.f32.gmra.mxu0 %v531
        %v636 = vpop.f32.mrf.mxu0
        %v637 = vadd.f32 0.0, %v636
        %v638 = vpop.f32.mrf.mxu0
        %639 = vmatprep.mubr.f32.mxu0 0.0
        %640 = vmatmul.mubr.f32.gmra.mxu0 %v534
        %v641 = vpop.f32.mrf.mxu0
        %v642 = vadd.f32 0.0, %v641
        %v643 = vpop.f32.mrf.mxu0
        %644 = vdwg.mxu0
        %v646 = vsel %vm511, %v491, 0
        %v649 = vsel %vm511, %v492, 0
        %v652 = vsel %vm511, %v493, 0
        %v655 = vsel %vm511, %v494, 0
        %v658 = vsel %vm511, %v495, 0
        %v661 = vsel %vm511, %v496, 0
        %v664 = vsel %vm511, %v497, 0
        %v667 = vsel %vm511, %v498, 0
        %v670 = vsel %vm536, %v499, 0
        %672 = vmatprep.subr.mxu0 0.0
        %673 = vmatpush1.msra.mxu0 0.0
        %674 = vmatprep.subr.mxu0 0.0
        %675 = vmatpush1.msra.mxu0 0.0
        %676 = vmatprep.subr.mxu0 0.0
        %677 = vmatpush1.msra.mxu0 0.0
        %678 = vmatprep.subr.mxu0 0.0
        %679 = vmatpush1.msra.mxu0 0.0
        %680 = vmatprep.subr.mxu0 0.0
        %681 = vmatpush1.msra.mxu0 0.0
        %682 = vmatprep.subr.mxu0 0.0
        %683 = vmatpush1.msra.mxu0 0.0
        %684 = vmatprep.subr.mxu0 0.0
        %685 = vmatpush1.msra.mxu0 0.0
        %686 = vmatprep.subr.mxu0 0.0
        %687 = vmatpush1.msra.mxu0 0.0
        %688 = vmatprep.subr.mxu0 0.0
        %689 = vmatpush1.msra.mxu0 0.0
        %690 = vmatprep.subr.mxu0 0.0
        %691 = vmatpush1.msra.mxu0 0.0
        %692 = vmatprep.subr.mxu0 0.0
        %693 = vmatpush1.msra.mxu0 0.0
        %694 = vmatprep.subr.mxu0 0.0
        %695 = vmatpush1.msra.mxu0 0.0
        %696 = vmatprep.subr.mxu0 0.0
        %697 = vmatpush1.msra.mxu0 0.0
        %698 = vmatprep.subr.mxu0 0.0
        %699 = vmatpush1.msra.mxu0 0.0
        %700 = vmatprep.subr.mxu0 0.0
        %701 = vmatpush1.msra.mxu0 0.0
        %702 = vmatprep.subr.mxu0 0.0
        %703 = vmatpush1.msra.mxu0 %v670
        %704 = vmatprep.subr.mxu0 0.0
        %705 = vmatpush2.msra.mxu0 0.0
        %706 = vmatprep.subr.mxu0 0.0
        %707 = vmatpush2.msra.mxu0 0.0
        %708 = vmatprep.subr.mxu0 0.0
        %709 = vmatpush2.msra.mxu0 0.0
        %710 = vmatprep.subr.mxu0 0.0
        %711 = vmatpush2.msra.mxu0 0.0
        %712 = vmatprep.subr.mxu0 0.0
        %713 = vmatpush2.msra.mxu0 0.0
        %714 = vmatprep.subr.mxu0 0.0
        %715 = vmatpush2.msra.mxu0 0.0
        %716 = vmatprep.subr.mxu0 0.0
        %717 = vmatpush2.msra.mxu0 0.0
        %718 = vmatprep.subr.mxu0 0.0
        %719 = vmatpush2.msra.mxu0 0.0
        %720 = vmatprep.subr.mxu0 0.0
        %721 = vmatpush2.msra.mxu0 0.0
        %722 = vmatprep.subr.mxu0 0.0
        %723 = vmatpush2.msra.mxu0 0.0
        %724 = vmatprep.subr.mxu0 0.0
        %725 = vmatpush2.msra.mxu0 0.0
        %726 = vmatprep.subr.mxu0 0.0
        %727 = vmatpush2.msra.mxu0 0.0
        %728 = vmatprep.subr.mxu0 0.0
        %729 = vmatpush2.msra.mxu0 0.0
        %730 = vmatprep.subr.mxu0 0.0
        %731 = vmatpush2.msra.mxu0 0.0
        %732 = vmatprep.subr.mxu0 0.0
        %733 = vmatpush2.msra.mxu0 0.0
        %734 = vmatprep.subr.mxu0 0.0
        %735 = vmatpush2.msra.mxu0 0.0
        %736 = vmatprep.mubr.f32.mxu0 0.0
        %737 = vmatmul.mubr.f32.gmra.mxu0 %v646
        %v738 = vpop.f32.mrf.mxu0
        %v739 = vadd.f32 %v607, %v738
        %v740 = vpop.f32.mrf.mxu0
        %741 = vmatprep.mubr.f32.mxu0 0.0
        %742 = vmatmul.mubr.f32.gmra.mxu0 %v649
        %v743 = vpop.f32.mrf.mxu0
        %v744 = vadd.f32 %v612, %v743
        %v745 = vpop.f32.mrf.mxu0
        %746 = vmatprep.mubr.f32.mxu0 0.0
        %747 = vmatmul.mubr.f32.gmra.mxu0 %v652
        %v748 = vpop.f32.mrf.mxu0
        %v749 = vadd.f32 %v617, %v748
        %v750 = vpop.f32.mrf.mxu0
        %751 = vmatprep.mubr.f32.mxu0 0.0
        %752 = vmatmul.mubr.f32.gmra.mxu0 %v655
        %v753 = vpop.f32.mrf.mxu0
        %v754 = vadd.f32 %v622, %v753
        %v755 = vpop.f32.mrf.mxu0
        %756 = vmatprep.mubr.f32.mxu0 0.0
        %757 = vmatmul.mubr.f32.gmra.mxu0 %v658
        %v758 = vpop.f32.mrf.mxu0
        %v759 = vadd.f32 %v627, %v758
        %v760 = vpop.f32.mrf.mxu0
        %761 = vmatprep.mubr.f32.mxu0 0.0
        %762 = vmatmul.mubr.f32.gmra.mxu0 %v661
        %v763 = vpop.f32.mrf.mxu0
        %v764 = vadd.f32 %v632, %v763
        %v765 = vpop.f32.mrf.mxu0
        %766 = vmatprep.mubr.f32.mxu0 0.0
        %767 = vmatmul.mubr.f32.gmra.mxu0 %v664
        %v768 = vpop.f32.mrf.mxu0
        %v769 = vadd.f32 %v637, %v768
        %v770 = vpop.f32.mrf.mxu0
        %771 = vmatprep.mubr.f32.mxu0 0.0
        %772 = vmatmul.mubr.f32.gmra.mxu0 %v667
        %v773 = vpop.f32.mrf.mxu0
        %v774 = vadd.f32 %v642, %v773
        %v775 = vpop.f32.mrf.mxu0
        %776 = vdwg.mxu0
        %v777 = vld [vmem:[%s465 + $0x1] sm:$0xff]
        %v778 = vld [vmem:[%s465 + $0x11] sm:$0xff]
        %v779 = vld [vmem:[%s465 + $0x21] sm:$0xff]
        %v780 = vld [vmem:[%s465 + $0x31] sm:$0xff]
        %v781 = vld [vmem:[%s465 + $0x41] sm:$0xff]
        %v782 = vld [vmem:[%s465 + $0x51] sm:$0xff]
        %v783 = vld [vmem:[%s465 + $0x61] sm:$0xff]
        %v784 = vld [vmem:[%s465 + $0x71] sm:$0xff]
        %s785 = scalar_lea.vmem %s1, 8
        %v786 = vld [vmem:[%s785] sm:$0xf]
        %v788 = vsel %vm511, %v777, 0
        %v791 = vsel %vm511, %v778, 0
        %v794 = vsel %vm511, %v779, 0
        %v797 = vsel %vm511, %v780, 0
        %v800 = vsel %vm511, %v781, 0
        %v803 = vsel %vm511, %v782, 0
        %v806 = vsel %vm511, %v783, 0
        %v809 = vsel %vm511, %v784, 0
        %v812 = vsel %vm536, %v786, 0
        %814 = vmatprep.subr.mxu0 0.0
        %815 = vmatpush1.msra.mxu0 0.0
        %816 = vmatprep.subr.mxu0 0.0
        %817 = vmatpush1.msra.mxu0 0.0
        %818 = vmatprep.subr.mxu0 0.0
        %819 = vmatpush1.msra.mxu0 0.0
        %820 = vmatprep.subr.mxu0 0.0
        %821 = vmatpush1.msra.mxu0 0.0
        %822 = vmatprep.subr.mxu0 0.0
        %823 = vmatpush1.msra.mxu0 0.0
        %824 = vmatprep.subr.mxu0 0.0
        %825 = vmatpush1.msra.mxu0 0.0
        %826 = vmatprep.subr.mxu0 0.0
        %827 = vmatpush1.msra.mxu0 0.0
        %828 = vmatprep.subr.mxu0 0.0
        %829 = vmatpush1.msra.mxu0 0.0
        %830 = vmatprep.subr.mxu0 0.0
        %831 = vmatpush1.msra.mxu0 0.0
        %832 = vmatprep.subr.mxu0 0.0
        %833 = vmatpush1.msra.mxu0 0.0
        %834 = vmatprep.subr.mxu0 0.0
        %835 = vmatpush1.msra.mxu0 0.0
        %836 = vmatprep.subr.mxu0 0.0
        %837 = vmatpush1.msra.mxu0 0.0
        %838 = vmatprep.subr.mxu0 0.0
        %839 = vmatpush1.msra.mxu0 0.0
        %840 = vmatprep.subr.mxu0 0.0
        %841 = vmatpush1.msra.mxu0 0.0
        %842 = vmatprep.subr.mxu0 0.0
        %843 = vmatpush1.msra.mxu0 0.0
        %844 = vmatprep.subr.mxu0 0.0
        %845 = vmatpush1.msra.mxu0 %v812
        %846 = vmatprep.subr.mxu0 0.0
        %847 = vmatpush2.msra.mxu0 0.0
        %848 = vmatprep.subr.mxu0 0.0
        %849 = vmatpush2.msra.mxu0 0.0
        %850 = vmatprep.subr.mxu0 0.0
        %851 = vmatpush2.msra.mxu0 0.0
        %852 = vmatprep.subr.mxu0 0.0
        %853 = vmatpush2.msra.mxu0 0.0
        %854 = vmatprep.subr.mxu0 0.0
        %855 = vmatpush2.msra.mxu0 0.0
        %856 = vmatprep.subr.mxu0 0.0
        %857 = vmatpush2.msra.mxu0 0.0
        %858 = vmatprep.subr.mxu0 0.0
        %859 = vmatpush2.msra.mxu0 0.0
        %860 = vmatprep.subr.mxu0 0.0
        %861 = vmatpush2.msra.mxu0 0.0
        %862 = vmatprep.subr.mxu0 0.0
        %863 = vmatpush2.msra.mxu0 0.0
        %864 = vmatprep.subr.mxu0 0.0
        %865 = vmatpush2.msra.mxu0 0.0
        %866 = vmatprep.subr.mxu0 0.0
        %867 = vmatpush2.msra.mxu0 0.0
        %868 = vmatprep.subr.mxu0 0.0
        %869 = vmatpush2.msra.mxu0 0.0
        %870 = vmatprep.subr.mxu0 0.0
        %871 = vmatpush2.msra.mxu0 0.0
        %872 = vmatprep.subr.mxu0 0.0
        %873 = vmatpush2.msra.mxu0 0.0
        %874 = vmatprep.subr.mxu0 0.0
        %875 = vmatpush2.msra.mxu0 0.0
        %876 = vmatprep.subr.mxu0 0.0
        %877 = vmatpush2.msra.mxu0 0.0
        %878 = vmatprep.mubr.f32.mxu0 0.0
        %879 = vmatmul.mubr.f32.gmra.mxu0 %v788
        %v880 = vpop.f32.mrf.mxu0
        %v881 = vadd.f32 0.0, %v880
        %v882 = vpop.f32.mrf.mxu0
        %883 = vmatprep.mubr.f32.mxu0 0.0
        %884 = vmatmul.mubr.f32.gmra.mxu0 %v791
        %v885 = vpop.f32.mrf.mxu0
        %v886 = vadd.f32 0.0, %v885
        %v887 = vpop.f32.mrf.mxu0
        %888 = vmatprep.mubr.f32.mxu0 0.0
        %889 = vmatmul.mubr.f32.gmra.mxu0 %v794
        %v890 = vpop.f32.mrf.mxu0
        %v891 = vadd.f32 0.0, %v890
        %v892 = vpop.f32.mrf.mxu0
        %893 = vmatprep.mubr.f32.mxu0 0.0
        %894 = vmatmul.mubr.f32.gmra.mxu0 %v797
        %v895 = vpop.f32.mrf.mxu0
        %v896 = vadd.f32 0.0, %v895
        %v897 = vpop.f32.mrf.mxu0
        %898 = vmatprep.mubr.f32.mxu0 0.0
        %899 = vmatmul.mubr.f32.gmra.mxu0 %v800
        %v900 = vpop.f32.mrf.mxu0
        %v901 = vadd.f32 0.0, %v900
        %v902 = vpop.f32.mrf.mxu0
        %903 = vmatprep.mubr.f32.mxu0 0.0
        %904 = vmatmul.mubr.f32.gmra.mxu0 %v803
        %v905 = vpop.f32.mrf.mxu0
        %v906 = vadd.f32 0.0, %v905
        %v907 = vpop.f32.mrf.mxu0
        %908 = vmatprep.mubr.f32.mxu0 0.0
        %909 = vmatmul.mubr.f32.gmra.mxu0 %v806
        %v910 = vpop.f32.mrf.mxu0
        %v911 = vadd.f32 0.0, %v910
        %v912 = vpop.f32.mrf.mxu0
        %913 = vmatprep.mubr.f32.mxu0 0.0
        %914 = vmatmul.mubr.f32.gmra.mxu0 %v809
        %v915 = vpop.f32.mrf.mxu0
        %v916 = vadd.f32 0.0, %v915
        %v917 = vpop.f32.mrf.mxu0
        %918 = vdwg.mxu0
        %v919 = vadd.f32 %v739, %v881
        %v920 = vadd.f32 %v744, %v886
        %v921 = vadd.f32 %v749, %v891
        %v922 = vadd.f32 %v754, %v896
        %v923 = vadd.f32 %v759, %v901
        %v924 = vadd.f32 %v764, %v906
        %v925 = vadd.f32 %v769, %v911
        %v926 = vadd.f32 %v774, %v916
        %s927 = scalar_lea.vmem %s465, 288 [#allocation2]
        %v928 = vld [vmem:[%s927] sm:$0xff]
        %v929 = vld [vmem:[%s927 + $0x10] sm:$0xff]
        %v930 = vld [vmem:[%s927 + $0x20] sm:$0xff]
        %v931 = vld [vmem:[%s927 + $0x30] sm:$0xff]
        %v932 = vld [vmem:[%s927 + $0x40] sm:$0xff]
        %v933 = vld [vmem:[%s927 + $0x50] sm:$0xff]
        %v934 = vld [vmem:[%s927 + $0x60] sm:$0xff]
        %v935 = vld [vmem:[%s927 + $0x70] sm:$0xff]
        %s936 = scalar_lea.vmem %s1, 12
        %v937 = vld [vmem:[%s936] sm:$0xf]
        %v939 = vsel %vm511, %v928, 0
        %v942 = vsel %vm511, %v929, 0
        %v945 = vsel %vm511, %v930, 0
        %v948 = vsel %vm511, %v931, 0
        %v951 = vsel %vm511, %v932, 0
        %v954 = vsel %vm511, %v933, 0
        %v957 = vsel %vm511, %v934, 0
        %v960 = vsel %vm511, %v935, 0
        %v963 = vsel %vm536, %v937, 0
        %965 = vmatprep.subr.mxu0 0.0
        %966 = vmatpush1.msra.mxu0 0.0
        %967 = vmatprep.subr.mxu0 0.0
        %968 = vmatpush1.msra.mxu0 0.0
        %969 = vmatprep.subr.mxu0 0.0
        %970 = vmatpush1.msra.mxu0 0.0
        %971 = vmatprep.subr.mxu0 0.0
        %972 = vmatpush1.msra.mxu0 0.0
        %973 = vmatprep.subr.mxu0 0.0
        %974 = vmatpush1.msra.mxu0 0.0
        %975 = vmatprep.subr.mxu0 0.0
        %976 = vmatpush1.msra.mxu0 0.0
        %977 = vmatprep.subr.mxu0 0.0
        %978 = vmatpush1.msra.mxu0 0.0
        %979 = vmatprep.subr.mxu0 0.0
        %980 = vmatpush1.msra.mxu0 0.0
        %981 = vmatprep.subr.mxu0 0.0
        %982 = vmatpush1.msra.mxu0 0.0
        %983 = vmatprep.subr.mxu0 0.0
        %984 = vmatpush1.msra.mxu0 0.0
        %985 = vmatprep.subr.mxu0 0.0
        %986 = vmatpush1.msra.mxu0 0.0
        %987 = vmatprep.subr.mxu0 0.0
        %988 = vmatpush1.msra.mxu0 0.0
        %989 = vmatprep.subr.mxu0 0.0
        %990 = vmatpush1.msra.mxu0 0.0
        %991 = vmatprep.subr.mxu0 0.0
        %992 = vmatpush1.msra.mxu0 0.0
        %993 = vmatprep.subr.mxu0 0.0
        %994 = vmatpush1.msra.mxu0 0.0
        %995 = vmatprep.subr.mxu0 0.0
        %996 = vmatpush1.msra.mxu0 %v963
        %997 = vmatprep.subr.mxu0 0.0
        %998 = vmatpush2.msra.mxu0 0.0
        %999 = vmatprep.subr.mxu0 0.0
        %1000 = vmatpush2.msra.mxu0 0.0
        %1001 = vmatprep.subr.mxu0 0.0
        %1002 = vmatpush2.msra.mxu0 0.0
        %1003 = vmatprep.subr.mxu0 0.0
        %1004 = vmatpush2.msra.mxu0 0.0
        %1005 = vmatprep.subr.mxu0 0.0
        %1006 = vmatpush2.msra.mxu0 0.0
        %1007 = vmatprep.subr.mxu0 0.0
        %1008 = vmatpush2.msra.mxu0 0.0
        %1009 = vmatprep.subr.mxu0 0.0
        %1010 = vmatpush2.msra.mxu0 0.0
        %1011 = vmatprep.subr.mxu0 0.0
        %1012 = vmatpush2.msra.mxu0 0.0
        %1013 = vmatprep.subr.mxu0 0.0
        %1014 = vmatpush2.msra.mxu0 0.0
        %1015 = vmatprep.subr.mxu0 0.0
        %1016 = vmatpush2.msra.mxu0 0.0
        %1017 = vmatprep.subr.mxu0 0.0
        %1018 = vmatpush2.msra.mxu0 0.0
        %1019 = vmatprep.subr.mxu0 0.0
        %1020 = vmatpush2.msra.mxu0 0.0
        %1021 = vmatprep.subr.mxu0 0.0
        %1022 = vmatpush2.msra.mxu0 0.0
        %1023 = vmatprep.subr.mxu0 0.0
        %1024 = vmatpush2.msra.mxu0 0.0
        %1025 = vmatprep.subr.mxu0 0.0
        %1026 = vmatpush2.msra.mxu0 0.0
        %1027 = vmatprep.subr.mxu0 0.0
        %1028 = vmatpush2.msra.mxu0 0.0
        %1029 = vmatprep.mubr.f32.mxu0 0.0
        %1030 = vmatmul.mubr.f32.gmra.mxu0 %v939
        %v1031 = vpop.f32.mrf.mxu0
        %v1032 = vadd.f32 0.0, %v1031
        %v1033 = vpop.f32.mrf.mxu0
        %1034 = vmatprep.mubr.f32.mxu0 0.0
        %1035 = vmatmul.mubr.f32.gmra.mxu0 %v942
        %v1036 = vpop.f32.mrf.mxu0
        %v1037 = vadd.f32 0.0, %v1036
        %v1038 = vpop.f32.mrf.mxu0
        %1039 = vmatprep.mubr.f32.mxu0 0.0
        %1040 = vmatmul.mubr.f32.gmra.mxu0 %v945
        %v1041 = vpop.f32.mrf.mxu0
        %v1042 = vadd.f32 0.0, %v1041
        %v1043 = vpop.f32.mrf.mxu0
        %1044 = vmatprep.mubr.f32.mxu0 0.0
        %1045 = vmatmul.mubr.f32.gmra.mxu0 %v948
        %v1046 = vpop.f32.mrf.mxu0
        %v1047 = vadd.f32 0.0, %v1046
        %v1048 = vpop.f32.mrf.mxu0
        %1049 = vmatprep.mubr.f32.mxu0 0.0
        %1050 = vmatmul.mubr.f32.gmra.mxu0 %v951
        %v1051 = vpop.f32.mrf.mxu0
        %v1052 = vadd.f32 0.0, %v1051
        %v1053 = vpop.f32.mrf.mxu0
        %1054 = vmatprep.mubr.f32.mxu0 0.0
        %1055 = vmatmul.mubr.f32.gmra.mxu0 %v954
        %v1056 = vpop.f32.mrf.mxu0
        %v1057 = vadd.f32 0.0, %v1056
        %v1058 = vpop.f32.mrf.mxu0
        %1059 = vmatprep.mubr.f32.mxu0 0.0
        %1060 = vmatmul.mubr.f32.gmra.mxu0 %v957
        %v1061 = vpop.f32.mrf.mxu0
        %v1062 = vadd.f32 0.0, %v1061
        %v1063 = vpop.f32.mrf.mxu0
        %1064 = vmatprep.mubr.f32.mxu0 0.0
        %1065 = vmatmul.mubr.f32.gmra.mxu0 %v960
        %v1066 = vpop.f32.mrf.mxu0
        %v1067 = vadd.f32 0.0, %v1066
        %v1068 = vpop.f32.mrf.mxu0
        %1069 = vdwg.mxu0
        %v1070 = vadd.f32 %v919, %v1032
        %v1071 = vadd.f32 %v920, %v1037
        %v1072 = vadd.f32 %v921, %v1042
        %v1073 = vadd.f32 %v922, %v1047
        %v1074 = vadd.f32 %v923, %v1052
        %v1075 = vadd.f32 %v924, %v1057
        %v1076 = vadd.f32 %v925, %v1062
        %v1077 = vadd.f32 %v926, %v1067
        %s1078 = scalar_lea.vmem %s465, 432 [#allocation2]
        %v1079 = vld [vmem:[%s1078] sm:$0xff]
        %v1080 = vld [vmem:[%s1078 + $0x10] sm:$0xff]
        %v1081 = vld [vmem:[%s1078 + $0x20] sm:$0xff]
        %v1082 = vld [vmem:[%s1078 + $0x30] sm:$0xff]
        %v1083 = vld [vmem:[%s1078 + $0x40] sm:$0xff]
        %v1084 = vld [vmem:[%s1078 + $0x50] sm:$0xff]
        %v1085 = vld [vmem:[%s1078 + $0x60] sm:$0xff]
        %v1086 = vld [vmem:[%s1078 + $0x70] sm:$0xff]
        %s1087 = scalar_lea.vmem %s1, 16
        %v1088 = vld [vmem:[%s1087] sm:$0xf]
        %v1090 = vsel %vm511, %v1079, 0
        %v1093 = vsel %vm511, %v1080, 0
        %v1096 = vsel %vm511, %v1081, 0
        %v1099 = vsel %vm511, %v1082, 0
        %v1102 = vsel %vm511, %v1083, 0
        %v1105 = vsel %vm511, %v1084, 0
        %v1108 = vsel %vm511, %v1085, 0
        %v1111 = vsel %vm511, %v1086, 0
        %v1114 = vsel %vm536, %v1088, 0
        %1116 = vmatprep.subr.mxu0 0.0
        %1117 = vmatpush1.msra.mxu0 0.0
        %1118 = vmatprep.subr.mxu0 0.0
        %1119 = vmatpush1.msra.mxu0 0.0
        %1120 = vmatprep.subr.mxu0 0.0
        %1121 = vmatpush1.msra.mxu0 0.0
        %1122 = vmatprep.subr.mxu0 0.0
        %1123 = vmatpush1.msra.mxu0 0.0
        %1124 = vmatprep.subr.mxu0 0.0
        %1125 = vmatpush1.msra.mxu0 0.0
        %1126 = vmatprep.subr.mxu0 0.0
        %1127 = vmatpush1.msra.mxu0 0.0
        %1128 = vmatprep.subr.mxu0 0.0
        %1129 = vmatpush1.msra.mxu0 0.0
        %1130 = vmatprep.subr.mxu0 0.0
        %1131 = vmatpush1.msra.mxu0 0.0
        %1132 = vmatprep.subr.mxu0 0.0
        %1133 = vmatpush1.msra.mxu0 0.0
        %1134 = vmatprep.subr.mxu0 0.0
        %1135 = vmatpush1.msra.mxu0 0.0
        %1136 = vmatprep.subr.mxu0 0.0
        %1137 = vmatpush1.msra.mxu0 0.0
        %1138 = vmatprep.subr.mxu0 0.0
        %1139 = vmatpush1.msra.mxu0 0.0
        %1140 = vmatprep.subr.mxu0 0.0
        %1141 = vmatpush1.msra.mxu0 0.0
        %1142 = vmatprep.subr.mxu0 0.0
        %1143 = vmatpush1.msra.mxu0 0.0
        %1144 = vmatprep.subr.mxu0 0.0
        %1145 = vmatpush1.msra.mxu0 0.0
        %1146 = vmatprep.subr.mxu0 0.0
        %1147 = vmatpush1.msra.mxu0 %v1114
        %1148 = vmatprep.subr.mxu0 0.0
        %1149 = vmatpush2.msra.mxu0 0.0
        %1150 = vmatprep.subr.mxu0 0.0
        %1151 = vmatpush2.msra.mxu0 0.0
        %1152 = vmatprep.subr.mxu0 0.0
        %1153 = vmatpush2.msra.mxu0 0.0
        %1154 = vmatprep.subr.mxu0 0.0
        %1155 = vmatpush2.msra.mxu0 0.0
        %1156 = vmatprep.subr.mxu0 0.0
        %1157 = vmatpush2.msra.mxu0 0.0
        %1158 = vmatprep.subr.mxu0 0.0
        %1159 = vmatpush2.msra.mxu0 0.0
        %1160 = vmatprep.subr.mxu0 0.0
        %1161 = vmatpush2.msra.mxu0 0.0
        %1162 = vmatprep.subr.mxu0 0.0
        %1163 = vmatpush2.msra.mxu0 0.0
        %1164 = vmatprep.subr.mxu0 0.0
        %1165 = vmatpush2.msra.mxu0 0.0
        %1166 = vmatprep.subr.mxu0 0.0
        %1167 = vmatpush2.msra.mxu0 0.0
        %1168 = vmatprep.subr.mxu0 0.0
        %1169 = vmatpush2.msra.mxu0 0.0
        %1170 = vmatprep.subr.mxu0 0.0
        %1171 = vmatpush2.msra.mxu0 0.0
        %1172 = vmatprep.subr.mxu0 0.0
        %1173 = vmatpush2.msra.mxu0 0.0
        %1174 = vmatprep.subr.mxu0 0.0
        %1175 = vmatpush2.msra.mxu0 0.0
        %1176 = vmatprep.subr.mxu0 0.0
        %1177 = vmatpush2.msra.mxu0 0.0
        %1178 = vmatprep.subr.mxu0 0.0
        %1179 = vmatpush2.msra.mxu0 0.0
        %1180 = vmatprep.mubr.f32.mxu0 0.0
        %1181 = vmatmul.mubr.f32.gmra.mxu0 %v1090
        %v1182 = vpop.f32.mrf.mxu0
        %v1183 = vadd.f32 0.0, %v1182
        %v1184 = vpop.f32.mrf.mxu0
        %1185 = vmatprep.mubr.f32.mxu0 0.0
        %1186 = vmatmul.mubr.f32.gmra.mxu0 %v1093
        %v1187 = vpop.f32.mrf.mxu0
        %v1188 = vadd.f32 0.0, %v1187
        %v1189 = vpop.f32.mrf.mxu0
        %1190 = vmatprep.mubr.f32.mxu0 0.0
        %1191 = vmatmul.mubr.f32.gmra.mxu0 %v1096
        %v1192 = vpop.f32.mrf.mxu0
        %v1193 = vadd.f32 0.0, %v1192
        %v1194 = vpop.f32.mrf.mxu0
        %1195 = vmatprep.mubr.f32.mxu0 0.0
        %1196 = vmatmul.mubr.f32.gmra.mxu0 %v1099
        %v1197 = vpop.f32.mrf.mxu0
        %v1198 = vadd.f32 0.0, %v1197
        %v1199 = vpop.f32.mrf.mxu0
        %1200 = vmatprep.mubr.f32.mxu0 0.0
        %1201 = vmatmul.mubr.f32.gmra.mxu0 %v1102
        %v1202 = vpop.f32.mrf.mxu0
        %v1203 = vadd.f32 0.0, %v1202
        %v1204 = vpop.f32.mrf.mxu0
        %1205 = vmatprep.mubr.f32.mxu0 0.0
        %1206 = vmatmul.mubr.f32.gmra.mxu0 %v1105
        %v1207 = vpop.f32.mrf.mxu0
        %v1208 = vadd.f32 0.0, %v1207
        %v1209 = vpop.f32.mrf.mxu0
        %1210 = vmatprep.mubr.f32.mxu0 0.0
        %1211 = vmatmul.mubr.f32.gmra.mxu0 %v1108
        %v1212 = vpop.f32.mrf.mxu0
        %v1213 = vadd.f32 0.0, %v1212
        %v1214 = vpop.f32.mrf.mxu0
        %1215 = vmatprep.mubr.f32.mxu0 0.0
        %1216 = vmatmul.mubr.f32.gmra.mxu0 %v1111
        %v1217 = vpop.f32.mrf.mxu0
        %v1218 = vadd.f32 0.0, %v1217
        %v1219 = vpop.f32.mrf.mxu0
        %1220 = vdwg.mxu0
        %v1221 = vadd.f32 %v1070, %v1183
        %v1222 = vadd.f32 %v1071, %v1188
        %v1223 = vadd.f32 %v1072, %v1193
        %v1224 = vadd.f32 %v1073, %v1198
        %v1225 = vadd.f32 %v1074, %v1203
        %v1226 = vadd.f32 %v1075, %v1208
        %v1227 = vadd.f32 %v1076, %v1213
        %v1228 = vadd.f32 %v1077, %v1218
        %v1229 = vld [vmem:[%s927 + $0x1] sm:$0xff]
        %v1230 = vld [vmem:[%s927 + $0x11] sm:$0xff]
        %v1231 = vld [vmem:[%s927 + $0x21] sm:$0xff]
        %v1232 = vld [vmem:[%s927 + $0x31] sm:$0xff]
        %v1233 = vld [vmem:[%s927 + $0x41] sm:$0xff]
        %v1234 = vld [vmem:[%s927 + $0x51] sm:$0xff]
        %v1235 = vld [vmem:[%s927 + $0x61] sm:$0xff]
        %v1236 = vld [vmem:[%s927 + $0x71] sm:$0xff]
        %s1237 = scalar_lea.vmem %s1, 20
        %v1238 = vld [vmem:[%s1237] sm:$0xf]
        %v1240 = vsel %vm511, %v1229, 0
        %v1243 = vsel %vm511, %v1230, 0
        %v1246 = vsel %vm511, %v1231, 0
        %v1249 = vsel %vm511, %v1232, 0
        %v1252 = vsel %vm511, %v1233, 0
        %v1255 = vsel %vm511, %v1234, 0
        %v1258 = vsel %vm511, %v1235, 0
        %v1261 = vsel %vm511, %v1236, 0
        %v1264 = vsel %vm536, %v1238, 0
        %1266 = vmatprep.subr.mxu0 0.0
        %1267 = vmatpush1.msra.mxu0 0.0
        %1268 = vmatprep.subr.mxu0 0.0
        %1269 = vmatpush1.msra.mxu0 0.0
        %1270 = vmatprep.subr.mxu0 0.0
        %1271 = vmatpush1.msra.mxu0 0.0
        %1272 = vmatprep.subr.mxu0 0.0
        %1273 = vmatpush1.msra.mxu0 0.0
        %1274 = vmatprep.subr.mxu0 0.0
        %1275 = vmatpush1.msra.mxu0 0.0
        %1276 = vmatprep.subr.mxu0 0.0
        %1277 = vmatpush1.msra.mxu0 0.0
        %1278 = vmatprep.subr.mxu0 0.0
        %1279 = vmatpush1.msra.mxu0 0.0
        %1280 = vmatprep.subr.mxu0 0.0
        %1281 = vmatpush1.msra.mxu0 0.0
        %1282 = vmatprep.subr.mxu0 0.0
        %1283 = vmatpush1.msra.mxu0 0.0
        %1284 = vmatprep.subr.mxu0 0.0
        %1285 = vmatpush1.msra.mxu0 0.0
        %1286 = vmatprep.subr.mxu0 0.0
        %1287 = vmatpush1.msra.mxu0 0.0
        %1288 = vmatprep.subr.mxu0 0.0
        %1289 = vmatpush1.msra.mxu0 0.0
        %1290 = vmatprep.subr.mxu0 0.0
        %1291 = vmatpush1.msra.mxu0 0.0
        %1292 = vmatprep.subr.mxu0 0.0
        %1293 = vmatpush1.msra.mxu0 0.0
        %1294 = vmatprep.subr.mxu0 0.0
        %1295 = vmatpush1.msra.mxu0 0.0
        %1296 = vmatprep.subr.mxu0 0.0
        %1297 = vmatpush1.msra.mxu0 %v1264
        %1298 = vmatprep.subr.mxu0 0.0
        %1299 = vmatpush2.msra.mxu0 0.0
        %1300 = vmatprep.subr.mxu0 0.0
        %1301 = vmatpush2.msra.mxu0 0.0
        %1302 = vmatprep.subr.mxu0 0.0
        %1303 = vmatpush2.msra.mxu0 0.0
        %1304 = vmatprep.subr.mxu0 0.0
        %1305 = vmatpush2.msra.mxu0 0.0
        %1306 = vmatprep.subr.mxu0 0.0
        %1307 = vmatpush2.msra.mxu0 0.0
        %1308 = vmatprep.subr.mxu0 0.0
        %1309 = vmatpush2.msra.mxu0 0.0
        %1310 = vmatprep.subr.mxu0 0.0
        %1311 = vmatpush2.msra.mxu0 0.0
        %1312 = vmatprep.subr.mxu0 0.0
        %1313 = vmatpush2.msra.mxu0 0.0
        %1314 = vmatprep.subr.mxu0 0.0
        %1315 = vmatpush2.msra.mxu0 0.0
        %1316 = vmatprep.subr.mxu0 0.0
        %1317 = vmatpush2.msra.mxu0 0.0
        %1318 = vmatprep.subr.mxu0 0.0
        %1319 = vmatpush2.msra.mxu0 0.0
        %1320 = vmatprep.subr.mxu0 0.0
        %1321 = vmatpush2.msra.mxu0 0.0
        %1322 = vmatprep.subr.mxu0 0.0
        %1323 = vmatpush2.msra.mxu0 0.0
        %1324 = vmatprep.subr.mxu0 0.0
        %1325 = vmatpush2.msra.mxu0 0.0
        %1326 = vmatprep.subr.mxu0 0.0
        %1327 = vmatpush2.msra.mxu0 0.0
        %1328 = vmatprep.subr.mxu0 0.0
        %1329 = vmatpush2.msra.mxu0 0.0
        %1330 = vmatprep.mubr.f32.mxu0 0.0
        %1331 = vmatmul.mubr.f32.gmra.mxu0 %v1240
        %v1332 = vpop.f32.mrf.mxu0
        %v1333 = vadd.f32 0.0, %v1332
        %v1334 = vpop.f32.mrf.mxu0
        %1335 = vmatprep.mubr.f32.mxu0 0.0
        %1336 = vmatmul.mubr.f32.gmra.mxu0 %v1243
        %v1337 = vpop.f32.mrf.mxu0
        %v1338 = vadd.f32 0.0, %v1337
        %v1339 = vpop.f32.mrf.mxu0
        %1340 = vmatprep.mubr.f32.mxu0 0.0
        %1341 = vmatmul.mubr.f32.gmra.mxu0 %v1246
        %v1342 = vpop.f32.mrf.mxu0
        %v1343 = vadd.f32 0.0, %v1342
        %v1344 = vpop.f32.mrf.mxu0
        %1345 = vmatprep.mubr.f32.mxu0 0.0
        %1346 = vmatmul.mubr.f32.gmra.mxu0 %v1249
        %v1347 = vpop.f32.mrf.mxu0
        %v1348 = vadd.f32 0.0, %v1347
        %v1349 = vpop.f32.mrf.mxu0
        %1350 = vmatprep.mubr.f32.mxu0 0.0
        %1351 = vmatmul.mubr.f32.gmra.mxu0 %v1252
        %v1352 = vpop.f32.mrf.mxu0
        %v1353 = vadd.f32 0.0, %v1352
        %v1354 = vpop.f32.mrf.mxu0
        %1355 = vmatprep.mubr.f32.mxu0 0.0
        %1356 = vmatmul.mubr.f32.gmra.mxu0 %v1255
        %v1357 = vpop.f32.mrf.mxu0
        %v1358 = vadd.f32 0.0, %v1357
        %v1359 = vpop.f32.mrf.mxu0
        %1360 = vmatprep.mubr.f32.mxu0 0.0
        %1361 = vmatmul.mubr.f32.gmra.mxu0 %v1258
        %v1362 = vpop.f32.mrf.mxu0
        %v1363 = vadd.f32 0.0, %v1362
        %v1364 = vpop.f32.mrf.mxu0
        %1365 = vmatprep.mubr.f32.mxu0 0.0
        %1366 = vmatmul.mubr.f32.gmra.mxu0 %v1261
        %v1367 = vpop.f32.mrf.mxu0
        %v1368 = vadd.f32 0.0, %v1367
        %v1369 = vpop.f32.mrf.mxu0
        %1370 = vdwg.mxu0
        %v1371 = vadd.f32 %v1221, %v1333
        %v1372 = vadd.f32 %v1222, %v1338
        %v1373 = vadd.f32 %v1223, %v1343
        %v1374 = vadd.f32 %v1224, %v1348
        %v1375 = vadd.f32 %v1225, %v1353
        %v1376 = vadd.f32 %v1226, %v1358
        %v1377 = vadd.f32 %v1227, %v1363
        %v1378 = vadd.f32 %v1228, %v1368
        %s1379 = scalar_lea.vmem %s465, 16 [#allocation2]
        %v1380 = vld [vmem:[%s1379] sm:$0xff]
        %v1381 = vld [vmem:[%s1379 + $0x10] sm:$0xff]
        %v1382 = vld [vmem:[%s1379 + $0x20] sm:$0xff]
        %v1383 = vld [vmem:[%s1379 + $0x30] sm:$0xff]
        %v1384 = vld [vmem:[%s1379 + $0x40] sm:$0xff]
        %v1385 = vld [vmem:[%s1379 + $0x50] sm:$0xff]
        %v1386 = vld [vmem:[%s1379 + $0x60] sm:$0xff]
        %v1387 = vld [vmem:[%s1379 + $0x70] sm:$0xff]
        %s1388 = scalar_lea.vmem %s1, 24
        %v1389 = vld [vmem:[%s1388] sm:$0xf]
        %v1391 = vsel %vm511, %v1380, 0
        %v1394 = vsel %vm511, %v1381, 0
        %v1397 = vsel %vm511, %v1382, 0
        %v1400 = vsel %vm511, %v1383, 0
        %v1403 = vsel %vm511, %v1384, 0
        %v1406 = vsel %vm511, %v1385, 0
        %v1409 = vsel %vm511, %v1386, 0
        %v1412 = vsel %vm511, %v1387, 0
        %v1415 = vsel %vm536, %v1389, 0
        %1417 = vmatprep.subr.mxu0 0.0
        %1418 = vmatpush1.msra.mxu0 0.0
        %1419 = vmatprep.subr.mxu0 0.0
        %1420 = vmatpush1.msra.mxu0 0.0
        %1421 = vmatprep.subr.mxu0 0.0
        %1422 = vmatpush1.msra.mxu0 0.0
        %1423 = vmatprep.subr.mxu0 0.0
        %1424 = vmatpush1.msra.mxu0 0.0
        %1425 = vmatprep.subr.mxu0 0.0
        %1426 = vmatpush1.msra.mxu0 0.0
        %1427 = vmatprep.subr.mxu0 0.0
        %1428 = vmatpush1.msra.mxu0 0.0
        %1429 = vmatprep.subr.mxu0 0.0
        %1430 = vmatpush1.msra.mxu0 0.0
        %1431 = vmatprep.subr.mxu0 0.0
        %1432 = vmatpush1.msra.mxu0 0.0
        %1433 = vmatprep.subr.mxu0 0.0
        %1434 = vmatpush1.msra.mxu0 0.0
        %1435 = vmatprep.subr.mxu0 0.0
        %1436 = vmatpush1.msra.mxu0 0.0
        %1437 = vmatprep.subr.mxu0 0.0
        %1438 = vmatpush1.msra.mxu0 0.0
        %1439 = vmatprep.subr.mxu0 0.0
        %1440 = vmatpush1.msra.mxu0 0.0
        %1441 = vmatprep.subr.mxu0 0.0
        %1442 = vmatpush1.msra.mxu0 0.0
        %1443 = vmatprep.subr.mxu0 0.0
        %1444 = vmatpush1.msra.mxu0 0.0
        %1445 = vmatprep.subr.mxu0 0.0
        %1446 = vmatpush1.msra.mxu0 0.0
        %1447 = vmatprep.subr.mxu0 0.0
        %1448 = vmatpush1.msra.mxu0 %v1415
        %1449 = vmatprep.subr.mxu0 0.0
        %1450 = vmatpush2.msra.mxu0 0.0
        %1451 = vmatprep.subr.mxu0 0.0
        %1452 = vmatpush2.msra.mxu0 0.0
        %1453 = vmatprep.subr.mxu0 0.0
        %1454 = vmatpush2.msra.mxu0 0.0
        %1455 = vmatprep.subr.mxu0 0.0
        %1456 = vmatpush2.msra.mxu0 0.0
        %1457 = vmatprep.subr.mxu0 0.0
        %1458 = vmatpush2.msra.mxu0 0.0
        %1459 = vmatprep.subr.mxu0 0.0
        %1460 = vmatpush2.msra.mxu0 0.0
        %1461 = vmatprep.subr.mxu0 0.0
        %1462 = vmatpush2.msra.mxu0 0.0
        %1463 = vmatprep.subr.mxu0 0.0
        %1464 = vmatpush2.msra.mxu0 0.0
        %1465 = vmatprep.subr.mxu0 0.0
        %1466 = vmatpush2.msra.mxu0 0.0
        %1467 = vmatprep.subr.mxu0 0.0
        %1468 = vmatpush2.msra.mxu0 0.0
        %1469 = vmatprep.subr.mxu0 0.0
        %1470 = vmatpush2.msra.mxu0 0.0
        %1471 = vmatprep.subr.mxu0 0.0
        %1472 = vmatpush2.msra.mxu0 0.0
        %1473 = vmatprep.subr.mxu0 0.0
        %1474 = vmatpush2.msra.mxu0 0.0
        %1475 = vmatprep.subr.mxu0 0.0
        %1476 = vmatpush2.msra.mxu0 0.0
        %1477 = vmatprep.subr.mxu0 0.0
        %1478 = vmatpush2.msra.mxu0 0.0
        %1479 = vmatprep.subr.mxu0 0.0
        %1480 = vmatpush2.msra.mxu0 0.0
        %1481 = vmatprep.mubr.f32.mxu0 0.0
        %1482 = vmatmul.mubr.f32.gmra.mxu0 %v1391
        %v1483 = vpop.f32.mrf.mxu0
        %v1484 = vadd.f32 0.0, %v1483
        %v1485 = vpop.f32.mrf.mxu0
        %1486 = vmatprep.mubr.f32.mxu0 0.0
        %1487 = vmatmul.mubr.f32.gmra.mxu0 %v1394
        %v1488 = vpop.f32.mrf.mxu0
        %v1489 = vadd.f32 0.0, %v1488
        %v1490 = vpop.f32.mrf.mxu0
        %1491 = vmatprep.mubr.f32.mxu0 0.0
        %1492 = vmatmul.mubr.f32.gmra.mxu0 %v1397
        %v1493 = vpop.f32.mrf.mxu0
        %v1494 = vadd.f32 0.0, %v1493
        %v1495 = vpop.f32.mrf.mxu0
        %1496 = vmatprep.mubr.f32.mxu0 0.0
        %1497 = vmatmul.mubr.f32.gmra.mxu0 %v1400
        %v1498 = vpop.f32.mrf.mxu0
        %v1499 = vadd.f32 0.0, %v1498
        %v1500 = vpop.f32.mrf.mxu0
        %1501 = vmatprep.mubr.f32.mxu0 0.0
        %1502 = vmatmul.mubr.f32.gmra.mxu0 %v1403
        %v1503 = vpop.f32.mrf.mxu0
        %v1504 = vadd.f32 0.0, %v1503
        %v1505 = vpop.f32.mrf.mxu0
        %1506 = vmatprep.mubr.f32.mxu0 0.0
        %1507 = vmatmul.mubr.f32.gmra.mxu0 %v1406
        %v1508 = vpop.f32.mrf.mxu0
        %v1509 = vadd.f32 0.0, %v1508
        %v1510 = vpop.f32.mrf.mxu0
        %1511 = vmatprep.mubr.f32.mxu0 0.0
        %1512 = vmatmul.mubr.f32.gmra.mxu0 %v1409
        %v1513 = vpop.f32.mrf.mxu0
        %v1514 = vadd.f32 0.0, %v1513
        %v1515 = vpop.f32.mrf.mxu0
        %1516 = vmatprep.mubr.f32.mxu0 0.0
        %1517 = vmatmul.mubr.f32.gmra.mxu0 %v1412
        %v1518 = vpop.f32.mrf.mxu0
        %v1519 = vadd.f32 0.0, %v1518
        %v1520 = vpop.f32.mrf.mxu0
        %1521 = vdwg.mxu0
        %v1522 = vadd.f32 %v1371, %v1484
        %v1523 = vadd.f32 %v1372, %v1489
        %v1524 = vadd.f32 %v1373, %v1494
        %v1525 = vadd.f32 %v1374, %v1499
        %v1526 = vadd.f32 %v1375, %v1504
        %v1527 = vadd.f32 %v1376, %v1509
        %v1528 = vadd.f32 %v1377, %v1514
        %v1529 = vadd.f32 %v1378, %v1519
        %s1530 = scalar_lea.vmem %s465, 160 [#allocation2]
        %v1531 = vld [vmem:[%s1530] sm:$0xff]
        %v1532 = vld [vmem:[%s1530 + $0x10] sm:$0xff]
        %v1533 = vld [vmem:[%s1530 + $0x20] sm:$0xff]
        %v1534 = vld [vmem:[%s1530 + $0x30] sm:$0xff]
        %v1535 = vld [vmem:[%s1530 + $0x40] sm:$0xff]
        %v1536 = vld [vmem:[%s1530 + $0x50] sm:$0xff]
        %v1537 = vld [vmem:[%s1530 + $0x60] sm:$0xff]
        %v1538 = vld [vmem:[%s1530 + $0x70] sm:$0xff]
        %s1539 = scalar_lea.vmem %s1, 28
        %v1540 = vld [vmem:[%s1539] sm:$0xf]
        %v1542 = vsel %vm511, %v1531, 0
        %v1545 = vsel %vm511, %v1532, 0
        %v1548 = vsel %vm511, %v1533, 0
        %v1551 = vsel %vm511, %v1534, 0
        %v1554 = vsel %vm511, %v1535, 0
        %v1557 = vsel %vm511, %v1536, 0
        %v1560 = vsel %vm511, %v1537, 0
        %v1563 = vsel %vm511, %v1538, 0
        %v1566 = vsel %vm536, %v1540, 0
        %1568 = vmatprep.subr.mxu0 0.0
        %1569 = vmatpush1.msra.mxu0 0.0
        %1570 = vmatprep.subr.mxu0 0.0
        %1571 = vmatpush1.msra.mxu0 0.0
        %1572 = vmatprep.subr.mxu0 0.0
        %1573 = vmatpush1.msra.mxu0 0.0
        %1574 = vmatprep.subr.mxu0 0.0
        %1575 = vmatpush1.msra.mxu0 0.0
        %1576 = vmatprep.subr.mxu0 0.0
        %1577 = vmatpush1.msra.mxu0 0.0
        %1578 = vmatprep.subr.mxu0 0.0
        %1579 = vmatpush1.msra.mxu0 0.0
        %1580 = vmatprep.subr.mxu0 0.0
        %1581 = vmatpush1.msra.mxu0 0.0
        %1582 = vmatprep.subr.mxu0 0.0
        %1583 = vmatpush1.msra.mxu0 0.0
        %1584 = vmatprep.subr.mxu0 0.0
        %1585 = vmatpush1.msra.mxu0 0.0
        %1586 = vmatprep.subr.mxu0 0.0
        %1587 = vmatpush1.msra.mxu0 0.0
        %1588 = vmatprep.subr.mxu0 0.0
        %1589 = vmatpush1.msra.mxu0 0.0
        %1590 = vmatprep.subr.mxu0 0.0
        %1591 = vmatpush1.msra.mxu0 0.0
        %1592 = vmatprep.subr.mxu0 0.0
        %1593 = vmatpush1.msra.mxu0 0.0
        %1594 = vmatprep.subr.mxu0 0.0
        %1595 = vmatpush1.msra.mxu0 0.0
        %1596 = vmatprep.subr.mxu0 0.0
        %1597 = vmatpush1.msra.mxu0 0.0
        %1598 = vmatprep.subr.mxu0 0.0
        %1599 = vmatpush1.msra.mxu0 %v1566
        %1600 = vmatprep.subr.mxu0 0.0
        %1601 = vmatpush2.msra.mxu0 0.0
        %1602 = vmatprep.subr.mxu0 0.0
        %1603 = vmatpush2.msra.mxu0 0.0
        %1604 = vmatprep.subr.mxu0 0.0
        %1605 = vmatpush2.msra.mxu0 0.0
        %1606 = vmatprep.subr.mxu0 0.0
        %1607 = vmatpush2.msra.mxu0 0.0
        %1608 = vmatprep.subr.mxu0 0.0
        %1609 = vmatpush2.msra.mxu0 0.0
        %1610 = vmatprep.subr.mxu0 0.0
        %1611 = vmatpush2.msra.mxu0 0.0
        %1612 = vmatprep.subr.mxu0 0.0
        %1613 = vmatpush2.msra.mxu0 0.0
        %1614 = vmatprep.subr.mxu0 0.0
        %1615 = vmatpush2.msra.mxu0 0.0
        %1616 = vmatprep.subr.mxu0 0.0
        %1617 = vmatpush2.msra.mxu0 0.0
        %1618 = vmatprep.subr.mxu0 0.0
        %1619 = vmatpush2.msra.mxu0 0.0
        %1620 = vmatprep.subr.mxu0 0.0
        %1621 = vmatpush2.msra.mxu0 0.0
        %1622 = vmatprep.subr.mxu0 0.0
        %1623 = vmatpush2.msra.mxu0 0.0
        %1624 = vmatprep.subr.mxu0 0.0
        %1625 = vmatpush2.msra.mxu0 0.0
        %1626 = vmatprep.subr.mxu0 0.0
        %1627 = vmatpush2.msra.mxu0 0.0
        %1628 = vmatprep.subr.mxu0 0.0
        %1629 = vmatpush2.msra.mxu0 0.0
        %1630 = vmatprep.subr.mxu0 0.0
        %1631 = vmatpush2.msra.mxu0 0.0
        %1632 = vmatprep.mubr.f32.mxu0 0.0
        %1633 = vmatmul.mubr.f32.gmra.mxu0 %v1542
        %v1634 = vpop.f32.mrf.mxu0
        %v1635 = vadd.f32 0.0, %v1634
        %v1636 = vpop.f32.mrf.mxu0
        %1637 = vmatprep.mubr.f32.mxu0 0.0
        %1638 = vmatmul.mubr.f32.gmra.mxu0 %v1545
        %v1639 = vpop.f32.mrf.mxu0
        %v1640 = vadd.f32 0.0, %v1639
        %v1641 = vpop.f32.mrf.mxu0
        %1642 = vmatprep.mubr.f32.mxu0 0.0
        %1643 = vmatmul.mubr.f32.gmra.mxu0 %v1548
        %v1644 = vpop.f32.mrf.mxu0
        %v1645 = vadd.f32 0.0, %v1644
        %v1646 = vpop.f32.mrf.mxu0
        %1647 = vmatprep.mubr.f32.mxu0 0.0
        %1648 = vmatmul.mubr.f32.gmra.mxu0 %v1551
        %v1649 = vpop.f32.mrf.mxu0
        %v1650 = vadd.f32 0.0, %v1649
        %v1651 = vpop.f32.mrf.mxu0
        %1652 = vmatprep.mubr.f32.mxu0 0.0
        %1653 = vmatmul.mubr.f32.gmra.mxu0 %v1554
        %v1654 = vpop.f32.mrf.mxu0
        %v1655 = vadd.f32 0.0, %v1654
        %v1656 = vpop.f32.mrf.mxu0
        %1657 = vmatprep.mubr.f32.mxu0 0.0
        %1658 = vmatmul.mubr.f32.gmra.mxu0 %v1557
        %v1659 = vpop.f32.mrf.mxu0
        %v1660 = vadd.f32 0.0, %v1659
        %v1661 = vpop.f32.mrf.mxu0
        %1662 = vmatprep.mubr.f32.mxu0 0.0
        %1663 = vmatmul.mubr.f32.gmra.mxu0 %v1560
        %v1664 = vpop.f32.mrf.mxu0
        %v1665 = vadd.f32 0.0, %v1664
        %v1666 = vpop.f32.mrf.mxu0
        %1667 = vmatprep.mubr.f32.mxu0 0.0
        %1668 = vmatmul.mubr.f32.gmra.mxu0 %v1563
        %v1669 = vpop.f32.mrf.mxu0
        %v1670 = vadd.f32 0.0, %v1669
        %v1671 = vpop.f32.mrf.mxu0
        %1672 = vdwg.mxu0
        %v1673 = vadd.f32 %v1522, %v1635
        %v1674 = vadd.f32 %v1523, %v1640
        %v1675 = vadd.f32 %v1524, %v1645
        %v1676 = vadd.f32 %v1525, %v1650
        %v1677 = vadd.f32 %v1526, %v1655
        %v1678 = vadd.f32 %v1527, %v1660
        %v1679 = vadd.f32 %v1528, %v1665
        %v1680 = vadd.f32 %v1529, %v1670
        %v1681 = vld [vmem:[%s1379 + $0x1] sm:$0xff]
        %v1682 = vld [vmem:[%s1379 + $0x11] sm:$0xff]
        %v1683 = vld [vmem:[%s1379 + $0x21] sm:$0xff]
        %v1684 = vld [vmem:[%s1379 + $0x31] sm:$0xff]
        %v1685 = vld [vmem:[%s1379 + $0x41] sm:$0xff]
        %v1686 = vld [vmem:[%s1379 + $0x51] sm:$0xff]
        %v1687 = vld [vmem:[%s1379 + $0x61] sm:$0xff]
        %v1688 = vld [vmem:[%s1379 + $0x71] sm:$0xff]
        %s1689 = scalar_lea.vmem %s1, 32
        %v1690 = vld [vmem:[%s1689] sm:$0xf]
        %v1692 = vsel %vm511, %v1681, 0
        %v1695 = vsel %vm511, %v1682, 0
        %v1698 = vsel %vm511, %v1683, 0
        %v1701 = vsel %vm511, %v1684, 0
        %v1704 = vsel %vm511, %v1685, 0
        %v1707 = vsel %vm511, %v1686, 0
        %v1710 = vsel %vm511, %v1687, 0
        %v1713 = vsel %vm511, %v1688, 0
        %v1716 = vsel %vm536, %v1690, 0
        %1718 = vmatprep.subr.mxu0 0.0
        %1719 = vmatpush1.msra.mxu0 0.0
        %1720 = vmatprep.subr.mxu0 0.0
        %1721 = vmatpush1.msra.mxu0 0.0
        %1722 = vmatprep.subr.mxu0 0.0
        %1723 = vmatpush1.msra.mxu0 0.0
        %1724 = vmatprep.subr.mxu0 0.0
        %1725 = vmatpush1.msra.mxu0 0.0
        %1726 = vmatprep.subr.mxu0 0.0
        %1727 = vmatpush1.msra.mxu0 0.0
        %1728 = vmatprep.subr.mxu0 0.0
        %1729 = vmatpush1.msra.mxu0 0.0
        %1730 = vmatprep.subr.mxu0 0.0
        %1731 = vmatpush1.msra.mxu0 0.0
        %1732 = vmatprep.subr.mxu0 0.0
        %1733 = vmatpush1.msra.mxu0 0.0
        %1734 = vmatprep.subr.mxu0 0.0
        %1735 = vmatpush1.msra.mxu0 0.0
        %1736 = vmatprep.subr.mxu0 0.0
        %1737 = vmatpush1.msra.mxu0 0.0
        %1738 = vmatprep.subr.mxu0 0.0
        %1739 = vmatpush1.msra.mxu0 0.0
        %1740 = vmatprep.subr.mxu0 0.0
        %1741 = vmatpush1.msra.mxu0 0.0
        %1742 = vmatprep.subr.mxu0 0.0
        %1743 = vmatpush1.msra.mxu0 0.0
        %1744 = vmatprep.subr.mxu0 0.0
        %1745 = vmatpush1.msra.mxu0 0.0
        %1746 = vmatprep.subr.mxu0 0.0
        %1747 = vmatpush1.msra.mxu0 0.0
        %1748 = vmatprep.subr.mxu0 0.0
        %1749 = vmatpush1.msra.mxu0 %v1716
        %1750 = vmatprep.subr.mxu0 0.0
        %1751 = vmatpush2.msra.mxu0 0.0
        %1752 = vmatprep.subr.mxu0 0.0
        %1753 = vmatpush2.msra.mxu0 0.0
        %1754 = vmatprep.subr.mxu0 0.0
        %1755 = vmatpush2.msra.mxu0 0.0
        %1756 = vmatprep.subr.mxu0 0.0
        %1757 = vmatpush2.msra.mxu0 0.0
        %1758 = vmatprep.subr.mxu0 0.0
        %1759 = vmatpush2.msra.mxu0 0.0
        %1760 = vmatprep.subr.mxu0 0.0
        %1761 = vmatpush2.msra.mxu0 0.0
        %1762 = vmatprep.subr.mxu0 0.0
        %1763 = vmatpush2.msra.mxu0 0.0
        %1764 = vmatprep.subr.mxu0 0.0
        %1765 = vmatpush2.msra.mxu0 0.0
        %1766 = vmatprep.subr.mxu0 0.0
        %1767 = vmatpush2.msra.mxu0 0.0
        %1768 = vmatprep.subr.mxu0 0.0
        %1769 = vmatpush2.msra.mxu0 0.0
        %1770 = vmatprep.subr.mxu0 0.0
        %1771 = vmatpush2.msra.mxu0 0.0
        %1772 = vmatprep.subr.mxu0 0.0
        %1773 = vmatpush2.msra.mxu0 0.0
        %1774 = vmatprep.subr.mxu0 0.0
        %1775 = vmatpush2.msra.mxu0 0.0
        %1776 = vmatprep.subr.mxu0 0.0
        %1777 = vmatpush2.msra.mxu0 0.0
        %1778 = vmatprep.subr.mxu0 0.0
        %1779 = vmatpush2.msra.mxu0 0.0
        %1780 = vmatprep.subr.mxu0 0.0
        %1781 = vmatpush2.msra.mxu0 0.0
        %1782 = vmatprep.mubr.f32.mxu0 0.0
        %1783 = vmatmul.mubr.f32.gmra.mxu0 %v1692
        %v1784 = vpop.f32.mrf.mxu0
        %v1785 = vadd.f32 0.0, %v1784
        %v1786 = vpop.f32.mrf.mxu0
        %1787 = vmatprep.mubr.f32.mxu0 0.0
        %1788 = vmatmul.mubr.f32.gmra.mxu0 %v1695
        %v1789 = vpop.f32.mrf.mxu0
        %v1790 = vadd.f32 0.0, %v1789
        %v1791 = vpop.f32.mrf.mxu0
        %1792 = vmatprep.mubr.f32.mxu0 0.0
        %1793 = vmatmul.mubr.f32.gmra.mxu0 %v1698
        %v1794 = vpop.f32.mrf.mxu0
        %v1795 = vadd.f32 0.0, %v1794
        %v1796 = vpop.f32.mrf.mxu0
        %1797 = vmatprep.mubr.f32.mxu0 0.0
        %1798 = vmatmul.mubr.f32.gmra.mxu0 %v1701
        %v1799 = vpop.f32.mrf.mxu0
        %v1800 = vadd.f32 0.0, %v1799
        %v1801 = vpop.f32.mrf.mxu0
        %1802 = vmatprep.mubr.f32.mxu0 0.0
        %1803 = vmatmul.mubr.f32.gmra.mxu0 %v1704
        %v1804 = vpop.f32.mrf.mxu0
        %v1805 = vadd.f32 0.0, %v1804
        %v1806 = vpop.f32.mrf.mxu0
        %1807 = vmatprep.mubr.f32.mxu0 0.0
        %1808 = vmatmul.mubr.f32.gmra.mxu0 %v1707
        %v1809 = vpop.f32.mrf.mxu0
        %v1810 = vadd.f32 0.0, %v1809
        %v1811 = vpop.f32.mrf.mxu0
        %1812 = vmatprep.mubr.f32.mxu0 0.0
        %1813 = vmatmul.mubr.f32.gmra.mxu0 %v1710
        %v1814 = vpop.f32.mrf.mxu0
        %v1815 = vadd.f32 0.0, %v1814
        %v1816 = vpop.f32.mrf.mxu0
        %1817 = vmatprep.mubr.f32.mxu0 0.0
        %1818 = vmatmul.mubr.f32.gmra.mxu0 %v1713
        %v1819 = vpop.f32.mrf.mxu0
        %v1820 = vadd.f32 0.0, %v1819
        %v1821 = vpop.f32.mrf.mxu0
        %1822 = vdwg.mxu0
        %v1823 = vadd.f32 %v1673, %v1785
        %v1824 = vadd.f32 %v1674, %v1790
        %v1825 = vadd.f32 %v1675, %v1795
        %v1826 = vadd.f32 %v1676, %v1800
        %v1827 = vadd.f32 %v1677, %v1805
        %v1828 = vadd.f32 %v1678, %v1810
        %v1829 = vadd.f32 %v1679, %v1815
        %v1830 = vadd.f32 %v1680, %v1820
        %v1831 = vld [vmem:[%s2] sm:$0x1]
        %v1833 = vlaneseq
        %v1834 = vshrl.u32 %v1833, 7
        %v1835 = vsub.s32 0, %v1834
        %v1836 = vrot.slane %v1831, %v1835
        %v1838 = vadd.f32 %v1823, %v1836
        %v1839 = vadd.f32 %v1824, %v1836
        %v1840 = vadd.f32 %v1825, %v1836
        %v1841 = vadd.f32 %v1826, %v1836
        %v1842 = vadd.f32 %v1827, %v1836
        %v1843 = vadd.f32 %v1828, %v1836
        %v1844 = vadd.f32 %v1829, %v1836
        %v1845 = vadd.f32 %v1830, %v1836
        %vm1846 = vcmask 64512
        %1847 = vst.msk [vmem:[%s490] sm:$0xff] %vm1846, %v1838
        %1848 = vst.msk [vmem:[%s490 + $0x8] sm:$0xff] %vm1846, %v1839
        %1849 = vst.msk [vmem:[%s490 + $0x10] sm:$0xff] %vm1846, %v1840
        %1850 = vst.msk [vmem:[%s490 + $0x18] sm:$0xff] %vm1846, %v1841
        %1851 = vst.msk [vmem:[%s490 + $0x20] sm:$0xff] %vm1846, %v1842
        %1852 = vst.msk [vmem:[%s490 + $0x28] sm:$0xff] %vm1846, %v1843
        %1853 = vst.msk [vmem:[%s490 + $0x30] sm:$0xff] %vm1846, %v1844
        %1854 = vst.msk [vmem:[%s490 + $0x38] sm:$0xff] %vm1846, %v1845
        %p1855 = scmp.lt.s32.totalorder %s14, 1
        %s1856 = scalar_select %p1855, %s14, 1
        %s1857 = smul.addr %s1856, 8
        %s1858 = smul.addr %s1857, 8
        %s1859 = scalar_lea.vmem %s3, %s1858
        // Predicated region
        $region71: #{tpu_custom_call.1} parent=65 // pred_check
          %p1860 = pneg %p100
        $region72: #{tpu_custom_call.1} parent=65 // pred_check_branch
          %1862 = sbr.rel (%p1860) target = $region74
        $region73: #{tpu_custom_call.1} parent=65 // pred_region
          _
        $region74: #{tpu_custom_call.1} parent=65 // pred_fallthru
          _
      $region66: #{tpu_custom_call.1} parent=5 // pred_fallthru
        _
      %p1863 = scmp.le.s32.totalorder 2, %s9
      // Predicated region
      $region75: #{tpu_custom_call.1} parent=5 // pred_check
        %p1864 = pneg %p1863
      $region76: #{tpu_custom_call.1} parent=5 // pred_check_branch
        %1866 = sbr.rel (%p1864) target = $region78
      $region77: #{tpu_custom_call.1} parent=5 // pred_region
        %s1867 = ssub.s32 %s9, 2
        // Predicated region
        $region79: #{tpu_custom_call.1} parent=77 // pred_check
          %p1868 = pneg %p106
        $region80: #{tpu_custom_call.1} parent=77 // pred_check_branch
          %1870 = sbr.rel (%p1868) target = $region82
        $region81: #{tpu_custom_call.1} parent=77 // pred_region
          %p1871 = scmp.lt.s32.totalorder %s15, 1
          %s1872 = scalar_select %p1871, %s15, 1
          %s1873 = smul.addr %s1872, 8
          %s1874 = smul.addr %s1873, 8
          %s1875 = scalar_lea.vmem %s3, %s1874
        $region82: #{tpu_custom_call.1} parent=77 // pred_fallthru
          _
      $region78: #{tpu_custom_call.1} parent=5 // pred_fallthru
        _
    $region6: #{tpu_custom_call.1} parent=1 // loop_footer
      %s13 = sadd.s32 1, %s9
    $region7: #{tpu_custom_call.1} parent=1 // loop_footer_branch
      %8 = sbr.rel target = $region3
    $region8: #{tpu_custom_call.1} parent=1 // loop_exit
      _

</llo_original>
